<compile_context>
chip_gen: v7x
topology: tpu7x:2x2x1
jax: 0.10.0
libtpu: 0.0.40
codegen_flags: <defaults>
</compile_context>

<pallas_src>
import functools

import jax
import jax.numpy as jnp
import numpy as np
from jax.experimental import pallas as pl
from jax.experimental.pallas import tpu as pltpu

LN_EPS = 1e-5
SOFTMAX_EPS = 1e-16    # matches torch_geometric.utils.softmax denominator eps
NEG_BIG = -1e30        # finite "-inf" so 0 * NEG_BIG stays finite inside matmuls
NCORES = 2             # leading core-parallel grid axis (both TCs on v7x)


def _round_up(v, m):
    return (v + m - 1) // m * m


def _device_kind():
    try:
        return jax.devices()[0].device_kind.lower()
    except Exception:
        return ""


def mlp_attention_kernel(x_ref, batch_ref, w_ref, vecs_ref, qg_ref, attw_ref,
                         eye_ref,
                         xafter_ref, m_ref, l_ref, acc_ref,
                         *, true_d, a_pad, b_pad, eup_bf16):
    i = pl.program_id(1)                      # inner axis: node tiles (reduction)
    tile_n = x_ref.shape[0]

    # ---- init this core's per-graph streaming state on its first node tile ----
    @pl.when(i == 0)
    def _():
        m_ref[...] = jnp.full_like(m_ref, NEG_BIG)
        l_ref[...] = jnp.zeros_like(l_ref)
        acc_ref[...] = jnp.zeros_like(acc_ref)

    # ---- self.conv : Linear (channel-dropout mask pre-folded into W) ----
    # bf16 operands, f32 MXU accumulation.
    xb = jnp.dot(x_ref[...], w_ref[...], preferred_element_type=jnp.float32)
    vecs = vecs_ref[...]                                   # (5, D_pad) f32
    bias, gamma, beta, alpha, dmask = (vecs[0:1, :], vecs[1:2, :], vecs[2:3, :],
                                       vecs[3:4, :], vecs[4:5, :])
    xb = xb + bias                                         # padded cols stay 0

    # ---- self.bn : two-pass LayerNorm over the true D features ----
    # TODO(synk): reference calls self.bn(x_before, batch); assumed standard
    # per-node LayerNorm over the feature dim (norm_type == 'layer').
    inv_d = jnp.float32(1.0 / true_d)
    mu = jnp.sum(xb, axis=-1, keepdims=True) * inv_d       # padded cols of xb = 0
    diff = xb - mu * dmask                                 # padded cols stay 0
    var = jnp.sum(diff * diff, axis=-1, keepdims=True) * inv_d
    xn = diff * jax.lax.rsqrt(var + LN_EPS)
    xn = xn * gamma + beta                                 # padded gamma/beta = 0

    # ---- self.prelu (per-channel alpha); self.dropout is identity in eval ----
    # TODO(synk): decide_loss_type() not given; assumed per-channel PReLU.
    xa = jnp.where(xn > 0, xn, alpha * xn)                 # (tile_n, D_pad) f32
    xafter_ref[...] = xa[:, :true_d].astype(xafter_ref.dtype)   # unpadded store

    # ---- attention projections: fused que|gate, lane-exact 2*A_pad wide ----
    proj = jnp.dot(xa.astype(jnp.bfloat16), qg_ref[...],
                   preferred_element_type=jnp.float32)     # (tile_n, 2*A_pad)
    if eup_bf16:
        # v6e/v7x: bf16 EUP roughly doubles transcendental throughput.
        que = jnp.tanh(proj[:, :a_pad].astype(jnp.bfloat16))
        gate = jax.nn.sigmoid(proj[:, a_pad:].astype(jnp.bfloat16))
        qgp = (que * gate).astype(jnp.float32)
    else:
        # v5e has no bf16 VPU/EUP path: stay in f32.
        que = jnp.tanh(proj[:, :a_pad])
        gate = jax.nn.sigmoid(proj[:, a_pad:])
        qgp = que * gate
    key = jnp.dot(qgp, attw_ref[...],
                  preferred_element_type=jnp.float32)      # (tile_n, 1)

    # ---- one-hot graph membership built from node->graph ids (no (B,N) I/O) --
    gid = jax.lax.broadcasted_iota(jnp.int32, (tile_n, b_pad), 1)
    oh = (batch_ref[...] == gid).astype(jnp.float32)       # (tile_n, b_pad)

    # ---- streaming segment softmax + pooled scatter_add (into output refs) ---
    keyb = jnp.where(oh > 0, key, jnp.float32(NEG_BIG))    # (tile_n, b_pad)
    tile_max = jnp.max(keyb, axis=0, keepdims=True)        # (1, b_pad)
    # (1, b_pad) -> (b_pad, 1) via precomputed-identity matmul (idle MXU slot).
    tile_max_col = jax.lax.dot_general(
        eye_ref[...], tile_max, (((1,), (1,)), ((), ())),
        preferred_element_type=jnp.float32)                # (b_pad, 1)

    m_prev = m_ref[...]
    m_new = jnp.maximum(m_prev, tile_max_col)              # (b_pad, 1)
    corr = jnp.exp(m_prev - m_new)                         # (b_pad, 1), <= 1

    node_m = jnp.dot(oh, m_new, preferred_element_type=jnp.float32)  # (tile_n,1)
    # clamp is a no-op for real nodes (their graph max >= their key); it only
    # guards exp() on zero-padded node rows.
    p = oh * jnp.exp(jnp.minimum(key - node_m, 0.0))       # (tile_n, b_pad)

    ones_col = jnp.ones((tile_n, 1), jnp.float32)
    p_sum = jax.lax.dot_general(p, ones_col, (((0,), (0,)), ((), ())),
                                preferred_element_type=jnp.float32)   # (b_pad,1)
    contrib = jax.lax.dot_general(p, xa, (((0,), (0,)), ((), ())),
                                  preferred_element_type=jnp.float32)  # (b_pad,D_pad)

    l_ref[...] = corr * l_ref[...] + p_sum
    acc_ref[...] = corr * acc_ref[...] + contrib
    m_ref[...] = m_new


def init_params(key, input_dim, output_dim, head_num, att_dim=100):
    """Deterministic kaiming-normal-ish initialization (synthetic weights)."""
    D = output_dim * head_num
    ks = jax.random.split(key, 4)
    f32 = jnp.float32
    return dict(
        w=(jax.random.normal(ks[0], (D, input_dim), f32)
           * jnp.sqrt(2.0 / input_dim)),                    # Linear weight (D, F)
        b=jnp.zeros((D,), f32),                             # Linear bias
        gamma=jnp.ones((D,), f32),                          # LayerNorm weight
        beta=jnp.zeros((D,), f32),                          # LayerNorm bias
        alpha=jnp.full((D,), 0.25, f32),                    # PReLU alpha
        que=(jax.random.normal(ks[1], (att_dim, D), f32)
             * jnp.sqrt(2.0 / D)),                          # que_transform (A, D)
        gate=(jax.random.normal(ks[2], (att_dim, D), f32)
              * jnp.sqrt(2.0 / D)),                         # gate_transform (A, D)
        attw=(jax.random.normal(ks[3], (att_dim, 1), f32)
              * jnp.sqrt(2.0)),                             # weight (A, 1)
    )


def mlp_module_forward(x, edge_attr, batch, num_graphs, params,
                       graph_dropout_rate, rng, *, tile_n=None,
                       x_after_dtype=jnp.float32):
    N, F_in = x.shape
    D = params["w"].shape[0]
    A = params["que"].shape[0]

    kind = _device_kind()
    is_v7 = ("v7" in kind) or ("7x" in kind)
    eup_bf16 = is_v7 or ("v6" in kind)
    # v7x has only 64 MiB physical VMEM per TC; v5e/v6e have 128 MiB.
    vmem_limit = (48 if is_v7 else 64) * 1024 * 1024

    # ---- graph dropout masks (deterministic given rng) ----
    k_node, k_edge = jax.random.split(rng)
    node_mask = jax.random.bernoulli(
        k_node, 1.0 - graph_dropout_rate, (1, F_in)).astype(jnp.float32)
    # Edge mask computed only for parity with the PyTorch module; edge_attr
    # never reaches the outputs (both with_edge branches call the same conv).
    _edge_mask = jax.random.bernoulli(
        k_edge, 1.0 - graph_dropout_rate,
        (1, edge_attr.shape[1])).astype(edge_attr.dtype)

    # ---- padding / tiling geometry ----
    D_pad = _round_up(D, 128)                 # lane-dense internal compute
    A_pad = _round_up(A, 128)                 # lane-exact fused que|gate matmul
    B_pad = _round_up(max(num_graphs, 1), 8)
    if tile_n is None:
        tile_n = min(1024, _round_up(N, 16))  # big tiles amortize step overhead
    tile_n = max(16, _round_up(tile_n, 16))
    n_tiles = -(-N // tile_n)
    tiles_per_core = max(1, -(-n_tiles // NCORES))
    N_pad = NCORES * tiles_per_core * tile_n

    # ---- operand prep: bf16 MXU operands, f32 per-channel vectors ----
    x_p = jnp.zeros((N_pad, F_in), jnp.bfloat16).at[:N].set(x.astype(jnp.bfloat16))
    # padded node rows get graph id -1 -> match no graph -> contribute nothing
    batch_p = jnp.full((N_pad, 1), -1, jnp.int32).at[:N, 0].set(
        batch.astype(jnp.int32))
    # Fold the binary channel-dropout mask into W (exact: mask entries are 0/1).
    w_masked = params["w"].T * node_mask[0][:, None]            # (F, D)
    w_t = jnp.zeros((F_in, D_pad), jnp.bfloat16).at[:, :D].set(
        w_masked.astype(jnp.bfloat16))
    # NOTE: LN statistics and the pooled sum rely on W, bias, gamma, beta,
    # alpha (and dmask) being EXACTLY zero for columns D..D_pad; keep these
    # zero-filled constructions if the padding scheme ever changes.
    vecs = jnp.zeros((5, D_pad), jnp.float32)
    vecs = vecs.at[0, :D].set(params["b"])
    vecs = vecs.at[1, :D].set(params["gamma"])
    vecs = vecs.at[2, :D].set(params["beta"])
    vecs = vecs.at[3, :D].set(params["alpha"])
    vecs = vecs.at[4, :D].set(1.0)                              # valid-col mask
    qg = jnp.zeros((D_pad, 2 * A_pad), jnp.bfloat16)
    qg = qg.at[:D, :A].set(params["que"].T.astype(jnp.bfloat16))
    qg = qg.at[:D, A_pad:A_pad + A].set(params["gate"].T.astype(jnp.bfloat16))
    attw = jnp.zeros((A_pad, 1), jnp.float32).at[:A].set(params["attw"])
    eye = jnp.eye(B_pad, dtype=jnp.float32)

    row = lambda c, i: (c * tiles_per_core + i, 0)
    const = lambda c, i: (0, 0)
    per_core = lambda c, i: (c, 0, 0)

    grid_spec = pltpu.PrefetchScalarGridSpec(
        num_scalar_prefetch=0,
        grid=(NCORES, tiles_per_core),
        in_specs=[
            pl.BlockSpec((tile_n, F_in), row),        # x (streamed)
            pl.BlockSpec((tile_n, 1), row),           # node -> graph ids
            pl.BlockSpec((F_in, D_pad), const),       # W^T (mask folded in)
            pl.BlockSpec((5, D_pad), const),          # bias/gamma/beta/alpha/mask
            pl.BlockSpec((D_pad, 2 * A_pad), const),  # fused que|gate
            pl.BlockSpec((A_pad, 1), const),          # attention weight
            pl.BlockSpec((B_pad, B_pad), const),      # identity (row->col max)
        ],
        out_specs=(
            pl.BlockSpec((tile_n, D), row),               # x_after (unpadded)
            pl.BlockSpec((None, B_pad, 1), per_core),     # per-core running max
            pl.BlockSpec((None, B_pad, 1), per_core),     # per-core exp-sum
            pl.BlockSpec((None, B_pad, D_pad), per_core), # per-core pooled acc
        ),
    )

    flops = 2 * N_pad * (F_in * D_pad + D_pad * 2 * A_pad + A_pad
                         + B_pad * (D_pad + 2))
    transcendentals = N_pad * (2 * A_pad + 2) + NCORES * tiles_per_core * B_pad
    bytes_accessed = (x_p.size * 2 + batch_p.size * 4 + w_t.size * 2
                      + vecs.size * 4 + qg.size * 2 + attw.size * 4
                      + eye.size * 4
                      + N_pad * D * np.dtype(x_after_dtype).itemsize
                      + NCORES * B_pad * (D_pad + 2) * 4)

    kernel = functools.partial(mlp_attention_kernel, true_d=D, a_pad=A_pad,
                               b_pad=B_pad, eup_bf16=eup_bf16)

    x_after_p, m_part, l_part, acc_part = pl.pallas_call(
        kernel,
        out_shape=(jax.ShapeDtypeStruct((N_pad, D), x_after_dtype),
                   jax.ShapeDtypeStruct((NCORES, B_pad, 1), jnp.float32),
                   jax.ShapeDtypeStruct((NCORES, B_pad, 1), jnp.float32),
                   jax.ShapeDtypeStruct((NCORES, B_pad, D_pad), jnp.float32)),
        grid_spec=grid_spec,
        compiler_params=pltpu.CompilerParams(
            dimension_semantics=("parallel", "arbitrary"),
            vmem_limit_bytes=vmem_limit),
        cost_estimate=pl.CostEstimate(flops=int(flops),
                                      transcendentals=int(transcendentals),
                                      bytes_accessed=int(bytes_accessed)),
    )(x_p, batch_p, w_t, vecs, qg, attw, eye)

    # ---- combine the per-core online-softmax partials (tiny XLA epilogue) ----
    m_p = m_part[..., 0]                                    # (NCORES, B_pad)
    m_g = jnp.max(m_p, axis=0)                              # (B_pad,)
    scale = jnp.exp(m_p - m_g[None, :])                     # (NCORES, B_pad)
    l = jnp.sum(l_part[..., 0] * scale, axis=0)             # (B_pad,)
    acc = jnp.sum(acc_part * scale[:, :, None], axis=0)     # (B_pad, D_pad)
    x_att = acc / (l + SOFTMAX_EPS)[:, None]

    return x_after_p[:N], x_att[:num_graphs, :D]


def _reference(x, batch, num_graphs, params, node_mask, *, eup_bf16):
    """Pure-JAX mirror of the module (same mixed-precision policy as kernel)."""
    f32 = jnp.float32
    xm = x.astype(jnp.bfloat16) * node_mask.astype(jnp.bfloat16)
    xb = jnp.dot(xm, params["w"].T.astype(jnp.bfloat16),
                 preferred_element_type=f32) + params["b"][None, :]
    mu = jnp.mean(xb, -1, keepdims=True)
    diff = xb - mu
    var = jnp.mean(diff * diff, -1, keepdims=True)
    xn = diff * jax.lax.rsqrt(var + LN_EPS)
    xn = xn * params["gamma"][None, :] + params["beta"][None, :]
    xa = jnp.where(xn > 0, xn, params["alpha"][None, :] * xn)
    xab = xa.astype(jnp.bfloat16)
    pq = jnp.dot(xab, params["que"].T.astype(jnp.bfloat16),
                 preferred_element_type=f32)
    pg = jnp.dot(xab, params["gate"].T.astype(jnp.bfloat16),
                 preferred_element_type=f32)
    if eup_bf16:
        que = jnp.tanh(pq.astype(jnp.bfloat16))
        gate = jax.nn.sigmoid(pg.astype(jnp.bfloat16))
        prod = (que * gate).astype(f32)
    else:
        que = jnp.tanh(pq)
        gate = jax.nn.sigmoid(pg)
        prod = que * gate
    key = jnp.dot(prod, params["attw"])[:, 0]
    oh = (jnp.arange(num_graphs)[:, None] == batch[None, :]).astype(f32)
    seg_max = jnp.max(jnp.where(oh > 0, key[None, :], NEG_BIG), axis=1)
    ex = jnp.exp(key - seg_max[batch])
    seg_sum = jnp.sum(oh * ex[None, :], axis=1)
    att = ex / (seg_sum[batch] + SOFTMAX_EPS)
    xatt = jnp.dot(oh, xa * att[:, None])
    return xa, xatt


if __name__ == "__main__":
    key = jax.random.PRNGKey(0)
    k_param, k_x, k_e, k_drop = jax.random.split(key, 4)

    # Small shapes consistent with the module: N nodes with F features,
    # D = output_dim * head_num hidden features, B graphs, attention dim 100.
    N, F_in, out_dim, heads, B = 88, 32, 8, 4, 3
    E, F_e = 24, 16
    att_dim = 100
    drop_rate = 0.25

    x = jax.random.normal(k_x, (N, F_in), jnp.float32)
    edge_attr = jax.random.normal(k_e, (E, F_e), jnp.float32)
    counts = (40, 28, 20)                                  # contiguous batch vec
    batch = jnp.concatenate(
        [jnp.full((c,), g, jnp.int32) for g, c in enumerate(counts)])

    params = init_params(k_param, F_in, out_dim, heads, att_dim)

    # small tile so the demo exercises multi-tile streaming + cross-core combine
    x_after, x_att = mlp_module_forward(
        x, edge_attr, batch, B, params,
        graph_dropout_rate=drop_rate, rng=k_drop, tile_n=32)
    jax.block_until_ready((x_after, x_att))

    D = out_dim * heads
    assert x_after.shape == (N, D)
    assert x_att.shape == (B, D)
    assert bool(jnp.all(jnp.isfinite(x_after)))
    assert bool(jnp.all(jnp.isfinite(x_att)))

    # Sanity-check against a pure-JAX reference using the same dropout mask and
    # the same transcendental-precision policy as the kernel.
    kind = _device_kind()
    eup_bf16 = ("v6" in kind) or ("v7" in kind) or ("7x" in kind)
    k_node, _ = jax.random.split(k_drop)
    node_mask = jax.random.bernoulli(
        k_node, 1.0 - drop_rate, (1, F_in)).astype(jnp.float32)
    ref_after, ref_att = _reference(x, batch, B, params, node_mask,
                                    eup_bf16=eup_bf16)
    np.testing.assert_allclose(np.asarray(x_after, dtype=np.float32),
                               np.asarray(ref_after, dtype=np.float32),
                               rtol=5e-2, atol=5e-2)
    np.testing.assert_allclose(np.asarray(x_att, dtype=np.float32),
                               np.asarray(ref_att, dtype=np.float32),
                               rtol=5e-2, atol=5e-2)

    print("KERNEL_OK")
</pallas_src>

<mosaic_0001>
module attributes {stable_mosaic.version = 11 : i64} {
  func.func @mlp_attention_kernel(%arg0: i32, %arg1: i32, %arg2: memref<32x32xbf16, #tpu.memory_space<vmem>>, %arg3: memref<32x1xi32, #tpu.memory_space<vmem>>, %arg4: memref<32x128xbf16, #tpu.memory_space<vmem>>, %arg5: memref<5x128xf32, #tpu.memory_space<vmem>>, %arg6: memref<128x256xbf16, #tpu.memory_space<vmem>>, %arg7: memref<128x1xf32, #tpu.memory_space<vmem>>, %arg8: memref<8x8xf32, #tpu.memory_space<vmem>>, %arg9: memref<32x32xf32, #tpu.memory_space<vmem>>, %arg10: memref<1x8x1xf32, #tpu.memory_space<vmem>>, %arg11: memref<1x8x1xf32, #tpu.memory_space<vmem>>, %arg12: memref<1x8x128xf32, #tpu.memory_space<vmem>>) attributes {dimension_semantics = [#tpu.dimension_semantics<parallel>, #tpu.dimension_semantics<arbitrary>], iteration_bounds = array<i64: 2, 2>, scalar_prefetch = 0 : i64, scratch_operands = 0 : i64, tpu.core_type = #tpu.core_type<tc>, window_params = [{transform_indices = @transform_0, window_bounds = array<i64: 32, 32>}, {transform_indices = @transform_1, window_bounds = array<i64: 32, 1>}, {pipeline_mode = #tpu.pipeline_mode<synchronous>, transform_indices = @transform_2, window_bounds = array<i64: 32, 128>}, {pipeline_mode = #tpu.pipeline_mode<synchronous>, transform_indices = @transform_3, window_bounds = array<i64: 5, 128>}, {pipeline_mode = #tpu.pipeline_mode<synchronous>, transform_indices = @transform_4, window_bounds = array<i64: 128, 256>}, {pipeline_mode = #tpu.pipeline_mode<synchronous>, transform_indices = @transform_5, window_bounds = array<i64: 128, 1>}, {pipeline_mode = #tpu.pipeline_mode<synchronous>, transform_indices = @transform_6, window_bounds = array<i64: 8, 8>}, {transform_indices = @transform_7, window_bounds = array<i64: 32, 32>}, {transform_indices = @transform_8, window_bounds = array<i64: 1, 8, 1>}, {transform_indices = @transform_9, window_bounds = array<i64: 1, 8, 1>}, {transform_indices = @transform_10, window_bounds = array<i64: 1, 8, 128>}]} {
    %c0_i32 = arith.constant 0 : i32
    %0 = arith.cmpi eq, %arg1, %c0_i32 : i32
    %1 = arith.extui %0 : i1 to i32
    %c0_i32_0 = arith.constant 0 : i32
    %2 = arith.cmpi ne, %1, %c0_i32_0 : i32
    scf.if %2 {
      %cst_52 = arith.constant -1.000000e+30 : f32
      %106 = vector.broadcast %cst_52 : f32 to vector<8x1xf32>
      %c0_53 = arith.constant 0 : index
      %c0_54 = arith.constant 0 : index
      %c0_55 = arith.constant 0 : index
      %107 = vector.load %arg10[%c0_53, %c0_54, %c0_55] : memref<1x8x1xf32, #tpu.memory_space<vmem>>, vector<1x8x1xf32>
      %108 = vector.shape_cast %107 : vector<1x8x1xf32> to vector<8x1xf32>
      %109 = vector.shape_cast %106 : vector<8x1xf32> to vector<1x8x1xf32>
      tpu.vector_store %arg10[%c0_53, %c0_54, %c0_55], %109 {strides = array<i32>} : memref<1x8x1xf32, #tpu.memory_space<vmem>>, vector<1x8x1xf32>,
      %cst_56 = arith.constant 0.000000e+00 : f32
      %110 = vector.broadcast %cst_56 : f32 to vector<8x1xf32>
      %c0_57 = arith.constant 0 : index
      %c0_58 = arith.constant 0 : index
      %c0_59 = arith.constant 0 : index
      %111 = vector.load %arg11[%c0_57, %c0_58, %c0_59] : memref<1x8x1xf32, #tpu.memory_space<vmem>>, vector<1x8x1xf32>
      %112 = vector.shape_cast %111 : vector<1x8x1xf32> to vector<8x1xf32>
      %113 = vector.shape_cast %110 : vector<8x1xf32> to vector<1x8x1xf32>
      tpu.vector_store %arg11[%c0_57, %c0_58, %c0_59], %113 {strides = array<i32>} : memref<1x8x1xf32, #tpu.memory_space<vmem>>, vector<1x8x1xf32>,
      %cst_60 = arith.constant 0.000000e+00 : f32
      %114 = vector.broadcast %cst_60 : f32 to vector<8x128xf32>
      %c0_61 = arith.constant 0 : index
      %c0_62 = arith.constant 0 : index
      %c0_63 = arith.constant 0 : index
      %115 = vector.load %arg12[%c0_61, %c0_62, %c0_63] : memref<1x8x128xf32, #tpu.memory_space<vmem>>, vector<1x8x128xf32>
      %116 = vector.shape_cast %115 : vector<1x8x128xf32> to vector<8x128xf32>
      %117 = vector.shape_cast %114 : vector<8x128xf32> to vector<1x8x128xf32>
      tpu.vector_store %arg12[%c0_61, %c0_62, %c0_63], %117 {strides = array<i32>} : memref<1x8x128xf32, #tpu.memory_space<vmem>>, vector<1x8x128xf32>,
    } else {
    }
    %c0 = arith.constant 0 : index
    %c0_1 = arith.constant 0 : index
    %3 = vector.load %arg2[%c0, %c0_1] : memref<32x32xbf16, #tpu.memory_space<vmem>>, vector<32x32xbf16>
    %c0_2 = arith.constant 0 : index
    %c0_3 = arith.constant 0 : index
    %4 = vector.load %arg4[%c0_2, %c0_3] : memref<32x128xbf16, #tpu.memory_space<vmem>>, vector<32x128xbf16>
    %cst = arith.constant dense<0.000000e+00> : vector<32x128xf32>
    %5 = tpu.matmul %3, %4, %cst {dimension_numbers = #tpu.dot_dimension_numbers<[1], [0], [0], [1], [0, 0, 1, 1], [], []>} : vector<32x32xbf16>, vector<32x128xbf16>, vector<32x128xf32> -> vector<32x128xf32>
    %c0_4 = arith.constant 0 : index
    %c0_5 = arith.constant 0 : index
    %6 = vector.load %arg5[%c0_4, %c0_5] : memref<5x128xf32, #tpu.memory_space<vmem>>, vector<5x128xf32>
    %7 = vector.extract_strided_slice %6 {offsets = [0, 0], sizes = [1, 128], strides = [1, 1]} : vector<5x128xf32> to vector<1x128xf32>
    %8 = vector.extract_strided_slice %6 {offsets = [1, 0], sizes = [1, 128], strides = [1, 1]} : vector<5x128xf32> to vector<1x128xf32>
    %9 = vector.extract_strided_slice %6 {offsets = [2, 0], sizes = [1, 128], strides = [1, 1]} : vector<5x128xf32> to vector<1x128xf32>
    %10 = vector.extract_strided_slice %6 {offsets = [3, 0], sizes = [1, 128], strides = [1, 1]} : vector<5x128xf32> to vector<1x128xf32>
    %11 = vector.extract_strided_slice %6 {offsets = [4, 0], sizes = [1, 128], strides = [1, 1]} : vector<5x128xf32> to vector<1x128xf32>
    %12 = vector.broadcast %7 : vector<1x128xf32> to vector<32x128xf32>
    %13 = arith.addf %5, %12 : vector<32x128xf32>
    %cst_6 = arith.constant dense<0.000000e+00> : vector<32xf32>
    %14 = vector.multi_reduction <add>, %13, %cst_6 [1] : vector<32x128xf32> to vector<32xf32>
    %15 = vector.shape_cast %14 : vector<32xf32> to vector<32x1xf32>
    %cst_7 = arith.constant 3.125000e-02 : f32
    %16 = vector.broadcast %cst_7 : f32 to vector<32x1xf32>
    %17 = arith.mulf %15, %16 : vector<32x1xf32>
    %18 = vector.broadcast %17 : vector<32x1xf32> to vector<32x128xf32>
    %19 = vector.broadcast %11 : vector<1x128xf32> to vector<32x128xf32>
    %20 = arith.mulf %18, %19 : vector<32x128xf32>
    %21 = arith.subf %13, %20 : vector<32x128xf32>
    %22 = arith.mulf %21, %21 : vector<32x128xf32>
    %cst_8 = arith.constant dense<0.000000e+00> : vector<32xf32>
    %23 = vector.multi_reduction <add>, %22, %cst_8 [1] : vector<32x128xf32> to vector<32xf32>
    %24 = vector.shape_cast %23 : vector<32xf32> to vector<32x1xf32>
    %cst_9 = arith.constant 3.125000e-02 : f32
    %25 = vector.broadcast %cst_9 : f32 to vector<32x1xf32>
    %26 = arith.mulf %24, %25 : vector<32x1xf32>
    %cst_10 = arith.constant 9.99999974E-6 : f32
    %27 = vector.broadcast %cst_10 : f32 to vector<32x1xf32>
    %28 = arith.addf %26, %27 : vector<32x1xf32>
    %29 = math.rsqrt %28 : vector<32x1xf32>
    %30 = vector.broadcast %29 : vector<32x1xf32> to vector<32x128xf32>
    %31 = arith.mulf %21, %30 : vector<32x128xf32>
    %32 = vector.broadcast %8 : vector<1x128xf32> to vector<32x128xf32>
    %33 = arith.mulf %31, %32 : vector<32x128xf32>
    %34 = vector.broadcast %9 : vector<1x128xf32> to vector<32x128xf32>
    %35 = arith.addf %33, %34 : vector<32x128xf32>
    %cst_11 = arith.constant 0.000000e+00 : f32
    %36 = vector.broadcast %cst_11 : f32 to vector<32x128xf32>
    %37 = arith.cmpf ogt, %35, %36 : vector<32x128xf32>
    %38 = vector.broadcast %10 : vector<1x128xf32> to vector<32x128xf32>
    %39 = arith.mulf %38, %35 : vector<32x128xf32>
    %40 = arith.select %37, %35, %39 : vector<32x128xi1>, vector<32x128xf32>
    %41 = vector.extract_strided_slice %40 {offsets = [0, 0], sizes = [32, 32], strides = [1, 1]} : vector<32x128xf32> to vector<32x32xf32>
    %c0_12 = arith.constant 0 : index
    %c0_13 = arith.constant 0 : index
    %42 = vector.load %arg9[%c0_12, %c0_13] : memref<32x32xf32, #tpu.memory_space<vmem>>, vector<32x32xf32>
    tpu.vector_store %arg9[%c0_12, %c0_13], %41 {strides = array<i32>} : memref<32x32xf32, #tpu.memory_space<vmem>>, vector<32x32xf32>,
    %43 = arith.truncf %40 : vector<32x128xf32> to vector<32x128xbf16>
    %c0_14 = arith.constant 0 : index
    %c0_15 = arith.constant 0 : index
    %44 = vector.load %arg6[%c0_14, %c0_15] : memref<128x256xbf16, #tpu.memory_space<vmem>>, vector<128x256xbf16>
    %cst_16 = arith.constant dense<0.000000e+00> : vector<32x256xf32>
    %45 = tpu.matmul %43, %44, %cst_16 {dimension_numbers = #tpu.dot_dimension_numbers<[1], [0], [0], [1], [0, 0, 1, 1], [], []>} : vector<32x128xbf16>, vector<128x256xbf16>, vector<32x256xf32> -> vector<32x256xf32>
    %46 = vector.extract_strided_slice %45 {offsets = [0, 0], sizes = [32, 128], strides = [1, 1]} : vector<32x256xf32> to vector<32x128xf32>
    %47 = math.tanh %46 : vector<32x128xf32>
    %48 = vector.extract_strided_slice %45 {offsets = [0, 128], sizes = [32, 128], strides = [1, 1]} : vector<32x256xf32> to vector<32x128xf32>
    %49 = arith.negf %48 : vector<32x128xf32>
    %50 = math.exp %49 : vector<32x128xf32>
    %cst_17 = arith.constant 1.000000e+00 : f32
    %51 = vector.broadcast %cst_17 : f32 to vector<32x128xf32>
    %52 = arith.addf %51, %50 : vector<32x128xf32>
    %53 = arith.divf %51, %52 : vector<32x128xf32>
    %54 = arith.mulf %47, %53 : vector<32x128xf32>
    %c0_18 = arith.constant 0 : index
    %c0_19 = arith.constant 0 : index
    %55 = vector.load %arg7[%c0_18, %c0_19] : memref<128x1xf32, #tpu.memory_space<vmem>>, vector<128x1xf32>
    %cst_20 = arith.constant dense<0.000000e+00> : vector<32x1xf32>
    %56 = tpu.matmul %54, %55, %cst_20 {dimension_numbers = #tpu.dot_dimension_numbers<[1], [0], [0], [1], [0, 0, 1, 1], [], []>} : vector<32x128xf32>, vector<128x1xf32>, vector<32x1xf32> -> vector<32x1xf32>
    %57 = tpu.iota {dimensions = array<i32: 1>} : vector<32x8xi32>
    %c0_21 = arith.constant 0 : index
    %c0_22 = arith.constant 0 : index
    %58 = vector.load %arg3[%c0_21, %c0_22] : memref<32x1xi32, #tpu.memory_space<vmem>>, vector<32x1xi32>
    %59 = vector.broadcast %58 : vector<32x1xi32> to vector<32x8xi32>
    %60 = arith.cmpi eq, %59, %57 : vector<32x8xi32>
    %61 = arith.extui %60 : vector<32x8xi1> to vector<32x8xi32>
    %62 = arith.sitofp %61 : vector<32x8xi32> to vector<32x8xf32>
    %cst_23 = arith.constant 0.000000e+00 : f32
    %63 = vector.broadcast %cst_23 : f32 to vector<32x8xf32>
    %64 = arith.cmpf ogt, %62, %63 : vector<32x8xf32>
    %cst_24 = arith.constant -1.000000e+30 : f32
    %65 = vector.shape_cast %56 : vector<32x1xf32> to vector<32x1xf32>
    %66 = vector.broadcast %65 : vector<32x1xf32> to vector<32x8xf32>
    %67 = vector.broadcast %cst_24 : f32 to vector<32x8xf32>
    %68 = arith.select %64, %66, %67 : vector<32x8xi1>, vector<32x8xf32>
    %cst_25 = arith.constant dense<0xFF800000> : vector<8xf32>
    %69 = vector.multi_reduction <maximumf>, %68, %cst_25 [0] : vector<32x8xf32> to vector<8xf32>
    %70 = vector.shape_cast %69 : vector<8xf32> to vector<1x8xf32>
    %c0_26 = arith.constant 0 : index
    %c0_27 = arith.constant 0 : index
    %71 = vector.load %arg8[%c0_26, %c0_27] : memref<8x8xf32, #tpu.memory_space<vmem>>, vector<8x8xf32>
    %cst_28 = arith.constant dense<0.000000e+00> : vector<8x1xf32>
    %72 = tpu.matmul %71, %70, %cst_28 {dimension_numbers = #tpu.dot_dimension_numbers<[1], [1], [0], [0], [0, 0, 1, 0], [], []>} : vector<8x8xf32>, vector<1x8xf32>, vector<8x1xf32> -> vector<8x1xf32>
    %c0_29 = arith.constant 0 : index
    %c0_30 = arith.constant 0 : index
    %c0_31 = arith.constant 0 : index
    %73 = vector.load %arg10[%c0_29, %c0_30, %c0_31] : memref<1x8x1xf32, #tpu.memory_space<vmem>>, vector<1x8x1xf32>
    %74 = vector.shape_cast %73 : vector<1x8x1xf32> to vector<8x1xf32>
    %75 = arith.maximumf %74, %72 : vector<8x1xf32>
    %76 = arith.subf %74, %75 : vector<8x1xf32>
    %77 = math.exp %76 : vector<8x1xf32>
    %cst_32 = arith.constant dense<0.000000e+00> : vector<32x1xf32>
    %78 = tpu.matmul %62, %75, %cst_32 {dimension_numbers = #tpu.dot_dimension_numbers<[1], [0], [0], [1], [0, 0, 1, 1], [], []>} : vector<32x8xf32>, vector<8x1xf32>, vector<32x1xf32> -> vector<32x1xf32>
    %79 = arith.subf %56, %78 : vector<32x1xf32>
    %cst_33 = arith.constant 0.000000e+00 : f32
    %80 = vector.broadcast %cst_33 : f32 to vector<32x1xf32>
    %81 = arith.minimumf %79, %80 : vector<32x1xf32>
    %82 = math.exp %81 : vector<32x1xf32>
    %83 = vector.broadcast %82 : vector<32x1xf32> to vector<32x8xf32>
    %84 = arith.mulf %62, %83 : vector<32x8xf32>
    %cst_34 = arith.constant 1.000000e+00 : f32
    %85 = vector.broadcast %cst_34 : f32 to vector<32x1xf32>
    %cst_35 = arith.constant dense<0.000000e+00> : vector<8x1xf32>
    %86 = tpu.matmul %84, %85, %cst_35 {dimension_numbers = #tpu.dot_dimension_numbers<[0], [0], [1], [1], [0, 1, 1, 1], [], []>} : vector<32x8xf32>, vector<32x1xf32>, vector<8x1xf32> -> vector<8x1xf32>
    %cst_36 = arith.constant dense<0.000000e+00> : vector<8x128xf32>
    %87 = tpu.matmul %84, %40, %cst_36 {dimension_numbers = #tpu.dot_dimension_numbers<[0], [0], [1], [1], [0, 1, 1, 1], [], []>} : vector<32x8xf32>, vector<32x128xf32>, vector<8x128xf32> -> vector<8x128xf32>
    %c0_37 = arith.constant 0 : index
    %c0_38 = arith.constant 0 : index
    %c0_39 = arith.constant 0 : index
    %88 = vector.load %arg11[%c0_37, %c0_38, %c0_39] : memref<1x8x1xf32, #tpu.memory_space<vmem>>, vector<1x8x1xf32>
    %89 = vector.shape_cast %88 : vector<1x8x1xf32> to vector<8x1xf32>
    %90 = arith.mulf %77, %89 : vector<8x1xf32>
    %91 = arith.addf %90, %86 : vector<8x1xf32>
    %c0_40 = arith.constant 0 : index
    %c0_41 = arith.constant 0 : index
    %c0_42 = arith.constant 0 : index
    %92 = vector.load %arg11[%c0_40, %c0_41, %c0_42] : memref<1x8x1xf32, #tpu.memory_space<vmem>>, vector<1x8x1xf32>
    %93 = vector.shape_cast %92 : vector<1x8x1xf32> to vector<8x1xf32>
    %94 = vector.shape_cast %91 : vector<8x1xf32> to vector<1x8x1xf32>
    tpu.vector_store %arg11[%c0_40, %c0_41, %c0_42], %94 {strides = array<i32>} : memref<1x8x1xf32, #tpu.memory_space<vmem>>, vector<1x8x1xf32>,
    %c0_43 = arith.constant 0 : index
    %c0_44 = arith.constant 0 : index
    %c0_45 = arith.constant 0 : index
    %95 = vector.load %arg12[%c0_43, %c0_44, %c0_45] : memref<1x8x128xf32, #tpu.memory_space<vmem>>, vector<1x8x128xf32>
    %96 = vector.shape_cast %95 : vector<1x8x128xf32> to vector<8x128xf32>
    %97 = vector.broadcast %77 : vector<8x1xf32> to vector<8x128xf32>
    %98 = arith.mulf %97, %96 : vector<8x128xf32>
    %99 = arith.addf %98, %87 : vector<8x128xf32>
    %c0_46 = arith.constant 0 : index
    %c0_47 = arith.constant 0 : index
    %c0_48 = arith.constant 0 : index
    %100 = vector.load %arg12[%c0_46, %c0_47, %c0_48] : memref<1x8x128xf32, #tpu.memory_space<vmem>>, vector<1x8x128xf32>
    %101 = vector.shape_cast %100 : vector<1x8x128xf32> to vector<8x128xf32>
    %102 = vector.shape_cast %99 : vector<8x128xf32> to vector<1x8x128xf32>
    tpu.vector_store %arg12[%c0_46, %c0_47, %c0_48], %102 {strides = array<i32>} : memref<1x8x128xf32, #tpu.memory_space<vmem>>, vector<1x8x128xf32>,
    %c0_49 = arith.constant 0 : index
    %c0_50 = arith.constant 0 : index
    %c0_51 = arith.constant 0 : index
    %103 = vector.load %arg10[%c0_49, %c0_50, %c0_51] : memref<1x8x1xf32, #tpu.memory_space<vmem>>, vector<1x8x1xf32>
    %104 = vector.shape_cast %103 : vector<1x8x1xf32> to vector<8x1xf32>
    %105 = vector.shape_cast %75 : vector<8x1xf32> to vector<1x8x1xf32>
    tpu.vector_store %arg10[%c0_49, %c0_50, %c0_51], %105 {strides = array<i32>} : memref<1x8x1xf32, #tpu.memory_space<vmem>>, vector<1x8x1xf32>,
    return
  }
  func.func @transform_0(%arg0: i32, %arg1: i32) -> (i32, i32) {
    %c2_i32 = arith.constant 2 : i32
    %0 = arith.muli %arg0, %c2_i32 : i32
    %1 = arith.addi %0, %arg1 : i32
    %c0_i32 = arith.constant 0 : i32
    %c0_i32_0 = arith.constant 0 : i32
    return %1, %c0_i32 : i32, i32
  }
  func.func @transform_1(%arg0: i32, %arg1: i32) -> (i32, i32) {
    %c2_i32 = arith.constant 2 : i32
    %0 = arith.muli %arg0, %c2_i32 : i32
    %1 = arith.addi %0, %arg1 : i32
    %c0_i32 = arith.constant 0 : i32
    %c0_i32_0 = arith.constant 0 : i32
    return %1, %c0_i32 : i32, i32
  }
  func.func @transform_2(%arg0: i32, %arg1: i32) -> (i32, i32) {
    %c0_i32 = arith.constant 0 : i32
    %c0_i32_0 = arith.constant 0 : i32
    %c0_i32_1 = arith.constant 0 : i32
    return %c0_i32, %c0_i32_0 : i32, i32
  }
  func.func @transform_3(%arg0: i32, %arg1: i32) -> (i32, i32) {
    %c0_i32 = arith.constant 0 : i32
    %c0_i32_0 = arith.constant 0 : i32
    %c0_i32_1 = arith.constant 0 : i32
    return %c0_i32, %c0_i32_0 : i32, i32
  }
  func.func @transform_4(%arg0: i32, %arg1: i32) -> (i32, i32) {
    %c0_i32 = arith.constant 0 : i32
    %c0_i32_0 = arith.constant 0 : i32
    %c0_i32_1 = arith.constant 0 : i32
    return %c0_i32, %c0_i32_0 : i32, i32
  }
  func.func @transform_5(%arg0: i32, %arg1: i32) -> (i32, i32) {
    %c0_i32 = arith.constant 0 : i32
    %c0_i32_0 = arith.constant 0 : i32
    %c0_i32_1 = arith.constant 0 : i32
    return %c0_i32, %c0_i32_0 : i32, i32
  }
  func.func @transform_6(%arg0: i32, %arg1: i32) -> (i32, i32) {
    %c0_i32 = arith.constant 0 : i32
    %c0_i32_0 = arith.constant 0 : i32
    %c0_i32_1 = arith.constant 0 : i32
    return %c0_i32, %c0_i32_0 : i32, i32
  }
  func.func @transform_7(%arg0: i32, %arg1: i32) -> (i32, i32) {
    %c2_i32 = arith.constant 2 : i32
    %0 = arith.muli %arg0, %c2_i32 : i32
    %1 = arith.addi %0, %arg1 : i32
    %c0_i32 = arith.constant 0 : i32
    %c0_i32_0 = arith.constant 0 : i32
    return %1, %c0_i32 : i32, i32
  }
  func.func @transform_8(%arg0: i32, %arg1: i32) -> (i32, i32, i32) {
    %c0_i32 = arith.constant 0 : i32
    %c0_i32_0 = arith.constant 0 : i32
    %c0_i32_1 = arith.constant 0 : i32
    return %arg0, %c0_i32, %c0_i32_0 : i32, i32, i32
  }
  func.func @transform_9(%arg0: i32, %arg1: i32) -> (i32, i32, i32) {
    %c0_i32 = arith.constant 0 : i32
    %c0_i32_0 = arith.constant 0 : i32
    %c0_i32_1 = arith.constant 0 : i32
    return %arg0, %c0_i32, %c0_i32_0 : i32, i32, i32
  }
  func.func @transform_10(%arg0: i32, %arg1: i32) -> (i32, i32, i32) {
    %c0_i32 = arith.constant 0 : i32
    %c0_i32_0 = arith.constant 0 : i32
    %c0_i32_1 = arith.constant 0 : i32
    return %arg0, %c0_i32, %c0_i32_0 : i32, i32, i32
  }
}

</mosaic_0001>

<llo_original>
// kernel: tpu_custom_call.1
$region0: #{tpu_custom_call.1}
  #allocation0 [shape = 'u32[]', space=smem, size = 0x4, offset = 0x4, fixed_abs, tag = 'smem constant byte address 0x4 - core index']
  #allocation1 [shape = 'u32[144,128]{1,0:T(1,128)}', space=vmem, size = 0x12000, scoped, tag = 'internal scratch']
  %s0 = inlined_call_operand.hbm [shape: bf16[128,32], index: 0, kind: input, shape index: {}]
  %s1 = inlined_call_operand.hbm [shape: s32[128,1], index: 1, kind: input, shape index: {}]
  %s2 = inlined_call_operand.hbm [shape: bf16[32,128], index: 2, kind: input, shape index: {}]
  %s3 = inlined_call_operand.hbm [shape: f32[5,128], index: 3, kind: input, shape index: {}]
  %s4 = inlined_call_operand.hbm [shape: bf16[128,256], index: 4, kind: input, shape index: {}]
  %s5 = inlined_call_operand.hbm [shape: f32[128,1], index: 5, kind: input, shape index: {}]
  %s6 = inlined_call_operand.hbm [shape: f32[8,8], index: 6, kind: input, shape index: {}]
  %s7 = inlined_call_operand.hbm [shape: f32[128,32], index: 7, kind: output, shape index: {0}]
  %s8 = inlined_call_operand.hbm [shape: f32[2,8,1], index: 8, kind: output, shape index: {1}]
  %s9 = inlined_call_operand.hbm [shape: f32[2,8,1], index: 9, kind: output, shape index: {2}]
  %s10 = inlined_call_operand.hbm [shape: f32[2,8,128], index: 10, kind: output, shape index: {3}]
  %11 = xla_tuple %s7, %s8, %s9, %s10
  %s12 = sld [smem:[#allocation0]]
  $region117: #{tpu_custom_call.1} parent=0
    _
  %s14 = ssub.s32 1, %s12
  %s15 = scalar_select 0, %s14, %s12
  $region1: #{tpu_custom_call.1} parent=0
    #allocation2 [shape = 'u8[16384]{0}', space=vmem, size = 0x4000, scoped, tag = 'input window, operand 0']
    #allocation3 [shape = 's32[2]{0}', space=sflag, size = 0x8, scoped, tag = 'scoped memory for tpu_custom_call.1']
    #allocation4 [shape = 's32[2]{0}', space=sflag, size = 0x8, scoped, tag = 'scoped memory for tpu_custom_call.1']
    #allocation5 [shape = 'u8[32768]{0}', space=vmem, size = 0x8000, scoped, tag = 'input window, operand 1']
    #allocation6 [shape = 's32[2]{0}', space=sflag, size = 0x8, scoped, tag = 'scoped memory for tpu_custom_call.1']
    #allocation7 [shape = 'u8[8192]{0}', space=vmem, size = 0x2000, scoped, tag = 'input window, operand 2, single buffered']
    #allocation8 [shape = 'u8[4096]{0}', space=vmem, size = 0x1000, scoped, tag = 'input window, operand 3, single buffered']
    #allocation9 [shape = 's32[1]{0}', space=sflag, size = 0x4, scoped, tag = 'scoped memory for tpu_custom_call.1']
    #allocation10 [shape = 'u8[65536]{0}', space=vmem, size = 0x10000, scoped, tag = 'input window, operand 4, single buffered']
    #allocation11 [shape = 'u8[65536]{0}', space=vmem, size = 0x10000, scoped, tag = 'input window, operand 5, single buffered']
    #allocation12 [shape = 's32[1]{0}', space=sflag, size = 0x4, scoped, tag = 'scoped memory for tpu_custom_call.1']
    #allocation13 [shape = 'u8[4096]{0}', space=vmem, size = 0x1000, scoped, tag = 'input window, operand 6, single buffered']
    #allocation14 [shape = 'u8[32768]{0}', space=vmem, size = 0x8000, scoped, tag = 'output window, operand 0']
    #allocation15 [shape = 'u8[8192]{0}', space=vmem, size = 0x2000, scoped, tag = 'output window, operand 1']
    #allocation16 [shape = 's32[2]{0}', space=sflag, size = 0x8, scoped, tag = 'scoped memory for tpu_custom_call.1']
    #allocation17 [shape = 'u8[8192]{0}', space=vmem, size = 0x2000, scoped, tag = 'output window, operand 2']
    #allocation18 [shape = 'u8[8192]{0}', space=vmem, size = 0x2000, scoped, tag = 'output window, operand 3']
    #allocation19 [shape = 's32[2]{0}', space=sflag, size = 0x8, scoped, tag = 'scoped memory for tpu_custom_call.1']
    %16 = vsyncpa [#allocation3], 0
    %s17 = scalar_lea.sflag [#allocation3], 1
    %18 = vsyncpa %s17, 0
    %19 = vsyncpa [#allocation6], 0
    %s20 = scalar_lea.sflag [#allocation6], 1
    %21 = vsyncpa %s20, 0
    %22 = vsyncpa [#allocation9], 0
    %23 = vsyncpa [#allocation12], 0
    %24 = vsyncpa [#allocation4], 0
    %s25 = scalar_lea.sflag [#allocation4], 1
    %26 = vsyncpa %s25, 0
    %27 = vsyncpa [#allocation16], 0
    %s28 = scalar_lea.sflag [#allocation16], 1
    %29 = vsyncpa %s28, 0
    %30 = vsyncpa [#allocation19], 0
    %s31 = scalar_lea.sflag [#allocation19], 1
    %32 = vsyncpa %s31, 0
    loop: start=0, step=1, limit=6
    $region2: #{tpu_custom_call.1} parent=1 // loop_pre_header
      _
    $region3: #{tpu_custom_call.1} parent=1 // loop_header
      %s34 = sphi 0, %s38
      %p35 = scmp.ge.s32.totalorder %s34, 6
      %s41 = sphi 0, %s53
      %s42 = sphi 0, %s49
      %s43 = sphi 0, %s41
      %s44 = sphi 0, %s42
      %s45 = sphi 0, %s43
      %s46 = sphi 0, %s44
      %s60 = sphi 0, %s62
      %s63 = sphi 0, %s60
      %s64 = sphi 0, %s63
      %s80 = sphi 0, %s64
      %s90 = sphi 0, %s92
      %s93 = sphi 0, %s90
      %s94 = sphi 0, %s93
      %s110 = sphi 0, %s94
      %s114 = sphi 0, %s114
      %s116 = sphi 0, %s114
      %s117 = sphi 0, %s116
      %s131 = sphi 0, %s117
      %s135 = sphi 0, %s135
      %s137 = sphi 0, %s135
      %s138 = sphi 0, %s137
      %s152 = sphi 0, %s138
      %s156 = sphi 0, %s156
      %s158 = sphi 0, %s156
      %s159 = sphi 0, %s158
      %s173 = sphi 0, %s159
      %s177 = sphi 0, %s177
      %s179 = sphi 0, %s177
      %s180 = sphi 0, %s179
      %s194 = sphi 0, %s180
      %s198 = sphi 0, %s198
      %s200 = sphi 0, %s198
      %s201 = sphi 0, %s200
      %s215 = sphi 0, %s201
      %s225 = sphi 0, %s227
      %s228 = sphi 0, %s225
      %s229 = sphi 0, %s228
      %s245 = sphi 0, %s229
      %s251 = sphi 0, %s253
      %s254 = sphi 0, %s251
      %s255 = sphi 0, %s254
      %s271 = sphi 0, %s255
      %s277 = sphi 0, %s279
      %s280 = sphi 0, %s277
      %s281 = sphi 0, %s280
      %s297 = sphi 0, %s281
      %s303 = sphi 0, %s305
      %s306 = sphi 0, %s303
      %s307 = sphi 0, %s306
      %s323 = sphi 0, %s307
    $region4: #{tpu_custom_call.1} parent=1 // loop_header_branch
      %37 = sbr.rel (%p35) target = $region8
    $region5: #{tpu_custom_call.1} parent=1 // loop_body
      %s39 = ssub.s32 %s34, 1
      %s40 = ssub.s32 %s34, 2
      %s47 = sadd.s32 1, %s42
      %p48 = scmp.ge.s32.totalorder %s47, 2
      %s49 = scalar_select %p48, 0, %s47
      %s50 = sadd.s32 1, %s41
      %s51 = scalar_select %p48, %s50, %s41
      %p52 = scmp.ge.s32.totalorder %s51, 2
      %s53 = scalar_select %p52, 0, %s51
      %s54 = smul.u32 %s41, 2
      %s55 = sadd.s32 %s54, %s42
      %s56 = smul.u32 %s53, 2
      %s57 = sadd.s32 %s56, %s49
      %s58 = ssub.s32 %s55, %s57
      %p59 = scmp.eq.s32.totalorder %s58, 0
      %s61 = sadd.s32 %s60, 1
      %s62 = scalar_select %p59, %s60, %s61
      %p65 = pneg %p59
      %p66 = scmp.eq.s32.totalorder %s34, 3
      %p67 = por %p65, %p66
      %p68 = scmp.ne.s32.totalorder %s60, %s63
      %p69 = scmp.eq.s32.totalorder %s34, 0
      %p70 = por %p68, %p69
      %p71 = scmp.ne.s32.totalorder %s60, %s63
      %p72 = scmp.eq.s32.totalorder %s39, 3
      %p73 = por %p71, %p72
      %p74 = scmp.ne.s32.totalorder %s63, %s64
      %p75 = scmp.eq.s32.totalorder %s39, 0
      %p76 = por %p74, %p75
      %p77 = scmp.ne.s32.totalorder %s63, %s64
      %p78 = scmp.eq.s32.totalorder %s40, 3
      %p79 = por %p77, %p78
      %p81 = scmp.ne.s32.totalorder %s64, %s80
      %p82 = scmp.eq.s32.totalorder %s40, 0
      %p83 = por %p81, %p82
      %s84 = smul.u32 %s41, 2
      %s85 = sadd.s32 %s84, %s42
      %s86 = smul.u32 %s53, 2
      %s87 = sadd.s32 %s86, %s49
      %s88 = ssub.s32 %s85, %s87
      %p89 = scmp.eq.s32.totalorder %s88, 0
      %s91 = sadd.s32 %s90, 1
      %s92 = scalar_select %p89, %s90, %s91
      %p95 = pneg %p89
      %p96 = scmp.eq.s32.totalorder %s34, 3
      %p97 = por %p95, %p96
      %p98 = scmp.ne.s32.totalorder %s90, %s93
      %p99 = scmp.eq.s32.totalorder %s34, 0
      %p100 = por %p98, %p99
      %p101 = scmp.ne.s32.totalorder %s90, %s93
      %p102 = scmp.eq.s32.totalorder %s39, 3
      %p103 = por %p101, %p102
      %p104 = scmp.ne.s32.totalorder %s93, %s94
      %p105 = scmp.eq.s32.totalorder %s39, 0
      %p106 = por %p104, %p105
      %p107 = scmp.ne.s32.totalorder %s93, %s94
      %p108 = scmp.eq.s32.totalorder %s40, 3
      %p109 = por %p107, %p108
      %p111 = scmp.ne.s32.totalorder %s94, %s110
      %p112 = scmp.eq.s32.totalorder %s40, 0
      %p113 = por %p111, %p112
      %s115 = sadd.s32 %s114, 1
      %p118 = scmp.eq.s32.totalorder %s34, 3
      %p119 = scmp.ne.s32.totalorder %s114, %s116
      %p120 = scmp.eq.s32.totalorder %s34, 0
      %p121 = por %p119, %p120
      %p122 = scmp.ne.s32.totalorder %s114, %s116
      %p123 = scmp.eq.s32.totalorder %s39, 3
      %p124 = por %p122, %p123
      %p125 = scmp.ne.s32.totalorder %s116, %s117
      %p126 = scmp.eq.s32.totalorder %s39, 0
      %p127 = por %p125, %p126
      %p128 = scmp.ne.s32.totalorder %s116, %s117
      %p129 = scmp.eq.s32.totalorder %s40, 3
      %p130 = por %p128, %p129
      %p132 = scmp.ne.s32.totalorder %s117, %s131
      %p133 = scmp.eq.s32.totalorder %s40, 0
      %p134 = por %p132, %p133
      %s136 = sadd.s32 %s135, 1
      %p139 = scmp.eq.s32.totalorder %s34, 3
      %p140 = scmp.ne.s32.totalorder %s135, %s137
      %p141 = scmp.eq.s32.totalorder %s34, 0
      %p142 = por %p140, %p141
      %p143 = scmp.ne.s32.totalorder %s135, %s137
      %p144 = scmp.eq.s32.totalorder %s39, 3
      %p145 = por %p143, %p144
      %p146 = scmp.ne.s32.totalorder %s137, %s138
      %p147 = scmp.eq.s32.totalorder %s39, 0
      %p148 = por %p146, %p147
      %p149 = scmp.ne.s32.totalorder %s137, %s138
      %p150 = scmp.eq.s32.totalorder %s40, 3
      %p151 = por %p149, %p150
      %p153 = scmp.ne.s32.totalorder %s138, %s152
      %p154 = scmp.eq.s32.totalorder %s40, 0
      %p155 = por %p153, %p154
      %s157 = sadd.s32 %s156, 1
      %p160 = scmp.eq.s32.totalorder %s34, 3
      %p161 = scmp.ne.s32.totalorder %s156, %s158
      %p162 = scmp.eq.s32.totalorder %s34, 0
      %p163 = por %p161, %p162
      %p164 = scmp.ne.s32.totalorder %s156, %s158
      %p165 = scmp.eq.s32.totalorder %s39, 3
      %p166 = por %p164, %p165
      %p167 = scmp.ne.s32.totalorder %s158, %s159
      %p168 = scmp.eq.s32.totalorder %s39, 0
      %p169 = por %p167, %p168
      %p170 = scmp.ne.s32.totalorder %s158, %s159
      %p171 = scmp.eq.s32.totalorder %s40, 3
      %p172 = por %p170, %p171
      %p174 = scmp.ne.s32.totalorder %s159, %s173
      %p175 = scmp.eq.s32.totalorder %s40, 0
      %p176 = por %p174, %p175
      %s178 = sadd.s32 %s177, 1
      %p181 = scmp.eq.s32.totalorder %s34, 3
      %p182 = scmp.ne.s32.totalorder %s177, %s179
      %p183 = scmp.eq.s32.totalorder %s34, 0
      %p184 = por %p182, %p183
      %p185 = scmp.ne.s32.totalorder %s177, %s179
      %p186 = scmp.eq.s32.totalorder %s39, 3
      %p187 = por %p185, %p186
      %p188 = scmp.ne.s32.totalorder %s179, %s180
      %p189 = scmp.eq.s32.totalorder %s39, 0
      %p190 = por %p188, %p189
      %p191 = scmp.ne.s32.totalorder %s179, %s180
      %p192 = scmp.eq.s32.totalorder %s40, 3
      %p193 = por %p191, %p192
      %p195 = scmp.ne.s32.totalorder %s180, %s194
      %p196 = scmp.eq.s32.totalorder %s40, 0
      %p197 = por %p195, %p196
      %s199 = sadd.s32 %s198, 1
      %p202 = scmp.eq.s32.totalorder %s34, 3
      %p203 = scmp.ne.s32.totalorder %s198, %s200
      %p204 = scmp.eq.s32.totalorder %s34, 0
      %p205 = por %p203, %p204
      %p206 = scmp.ne.s32.totalorder %s198, %s200
      %p207 = scmp.eq.s32.totalorder %s39, 3
      %p208 = por %p206, %p207
      %p209 = scmp.ne.s32.totalorder %s200, %s201
      %p210 = scmp.eq.s32.totalorder %s39, 0
      %p211 = por %p209, %p210
      %p212 = scmp.ne.s32.totalorder %s200, %s201
      %p213 = scmp.eq.s32.totalorder %s40, 3
      %p214 = por %p212, %p213
      %p216 = scmp.ne.s32.totalorder %s201, %s215
      %p217 = scmp.eq.s32.totalorder %s40, 0
      %p218 = por %p216, %p217
      %s219 = smul.u32 %s41, 2
      %s220 = sadd.s32 %s219, %s42
      %s221 = smul.u32 %s53, 2
      %s222 = sadd.s32 %s221, %s49
      %s223 = ssub.s32 %s220, %s222
      %p224 = scmp.eq.s32.totalorder %s223, 0
      %s226 = sadd.s32 %s225, 1
      %s227 = scalar_select %p224, %s225, %s226
      %p230 = pneg %p224
      %p231 = scmp.eq.s32.totalorder %s34, 3
      %p232 = por %p230, %p231
      %p233 = scmp.ne.s32.totalorder %s225, %s228
      %p234 = scmp.eq.s32.totalorder %s34, 0
      %p235 = por %p233, %p234
      %p236 = scmp.ne.s32.totalorder %s225, %s228
      %p237 = scmp.eq.s32.totalorder %s39, 3
      %p238 = por %p236, %p237
      %p239 = scmp.ne.s32.totalorder %s228, %s229
      %p240 = scmp.eq.s32.totalorder %s39, 0
      %p241 = por %p239, %p240
      %p242 = scmp.ne.s32.totalorder %s228, %s229
      %p243 = scmp.eq.s32.totalorder %s40, 3
      %p244 = por %p242, %p243
      %p246 = scmp.ne.s32.totalorder %s229, %s245
      %p247 = scmp.eq.s32.totalorder %s40, 0
      %p248 = por %p246, %p247
      %s249 = ssub.s32 %s41, %s53
      %p250 = scmp.eq.s32.totalorder %s249, 0
      %s252 = sadd.s32 %s251, 1
      %s253 = scalar_select %p250, %s251, %s252
      %p256 = pneg %p250
      %p257 = scmp.eq.s32.totalorder %s34, 3
      %p258 = por %p256, %p257
      %p259 = scmp.ne.s32.totalorder %s251, %s254
      %p260 = scmp.eq.s32.totalorder %s34, 0
      %p261 = por %p259, %p260
      %p262 = scmp.ne.s32.totalorder %s251, %s254
      %p263 = scmp.eq.s32.totalorder %s39, 3
      %p264 = por %p262, %p263
      %p265 = scmp.ne.s32.totalorder %s254, %s255
      %p266 = scmp.eq.s32.totalorder %s39, 0
      %p267 = por %p265, %p266
      %p268 = scmp.ne.s32.totalorder %s254, %s255
      %p269 = scmp.eq.s32.totalorder %s40, 3
      %p270 = por %p268, %p269
      %p272 = scmp.ne.s32.totalorder %s255, %s271
      %p273 = scmp.eq.s32.totalorder %s40, 0
      %p274 = por %p272, %p273
      %s275 = ssub.s32 %s41, %s53
      %p276 = scmp.eq.s32.totalorder %s275, 0
      %s278 = sadd.s32 %s277, 1
      %s279 = scalar_select %p276, %s277, %s278
      %p282 = pneg %p276
      %p283 = scmp.eq.s32.totalorder %s34, 3
      %p284 = por %p282, %p283
      %p285 = scmp.ne.s32.totalorder %s277, %s280
      %p286 = scmp.eq.s32.totalorder %s34, 0
      %p287 = por %p285, %p286
      %p288 = scmp.ne.s32.totalorder %s277, %s280
      %p289 = scmp.eq.s32.totalorder %s39, 3
      %p290 = por %p288, %p289
      %p291 = scmp.ne.s32.totalorder %s280, %s281
      %p292 = scmp.eq.s32.totalorder %s39, 0
      %p293 = por %p291, %p292
      %p294 = scmp.ne.s32.totalorder %s280, %s281
      %p295 = scmp.eq.s32.totalorder %s40, 3
      %p296 = por %p294, %p295
      %p298 = scmp.ne.s32.totalorder %s281, %s297
      %p299 = scmp.eq.s32.totalorder %s40, 0
      %p300 = por %p298, %p299
      %s301 = ssub.s32 %s41, %s53
      %p302 = scmp.eq.s32.totalorder %s301, 0
      %s304 = sadd.s32 %s303, 1
      %s305 = scalar_select %p302, %s303, %s304
      %p308 = pneg %p302
      %p309 = scmp.eq.s32.totalorder %s34, 3
      %p310 = por %p308, %p309
      %p311 = scmp.ne.s32.totalorder %s303, %s306
      %p312 = scmp.eq.s32.totalorder %s34, 0
      %p313 = por %p311, %p312
      %p314 = scmp.ne.s32.totalorder %s303, %s306
      %p315 = scmp.eq.s32.totalorder %s39, 3
      %p316 = por %p314, %p315
      %p317 = scmp.ne.s32.totalorder %s306, %s307
      %p318 = scmp.eq.s32.totalorder %s39, 0
      %p319 = por %p317, %p318
      %p320 = scmp.ne.s32.totalorder %s306, %s307
      %p321 = scmp.eq.s32.totalorder %s40, 3
      %p322 = por %p320, %p321
      %p324 = scmp.ne.s32.totalorder %s307, %s323
      %p325 = scmp.eq.s32.totalorder %s40, 0
      %p326 = por %p324, %p325
      %p327 = scmp.le.s32.totalorder 1, %s34
      %p328 = scmp.lt.s32.totalorder %s34, 5
      %p329 = pnand %p327, %p328
      %p330 = pneg %p329
      // Predicated region
      $region9: #{tpu_custom_call.1} parent=5 // pred_check
        _
      $region10: #{tpu_custom_call.1} parent=5 // pred_check_branch
        %332 = sbr.rel (%p329) target = $region12
      $region11: #{tpu_custom_call.1} parent=5 // pred_region
        %s333 = ssub.s32 %s34, 1
        // Predicated region
        $region13: #{tpu_custom_call.1} parent=11 // pred_check
          %p334 = pneg %p127
        $region14: #{tpu_custom_call.1} parent=11 // pred_check_branch
          %336 = sbr.rel (%p334) target = $region16
        $region15: #{tpu_custom_call.1} parent=11 // pred_region
          %s338 = ssub.s32 256, 256
          %339 = vsyncadd [#allocation6], %s338
          %s340 = sshll.u32 [#allocation7], 4
          %s341 = int_to_ptr.vmem [resolvable:$true] %s340
          %346 = dma.hbm_to_vmem [thread:$0]  %s2, 256, %s341, [#allocation6], 64, 64, 4
        $region16: #{tpu_custom_call.1} parent=11 // pred_fallthru
          _
        // Predicated region
        $region17: #{tpu_custom_call.1} parent=11 // pred_check
          %p347 = pneg %p148
        $region18: #{tpu_custom_call.1} parent=11 // pred_check_branch
          %349 = sbr.rel (%p347) target = $region20
        $region19: #{tpu_custom_call.1} parent=11 // pred_region
          %s351 = ssub.s32 128, 128
          %352 = vsyncadd [#allocation9], %s351
          %s354 = sshll.u32 [#allocation8], 4
          %s355 = int_to_ptr.vmem [resolvable:$true] %s354
          %357 = dma.hbm_to_vmem [thread:$0]  %s3, 128, %s355, [#allocation9]
        $region20: #{tpu_custom_call.1} parent=11 // pred_fallthru
          _
        // Predicated region
        $region21: #{tpu_custom_call.1} parent=11 // pred_check
          %p358 = pneg %p169
        $region22: #{tpu_custom_call.1} parent=11 // pred_check_branch
          %360 = sbr.rel (%p358) target = $region24
        $region23: #{tpu_custom_call.1} parent=11 // pred_region
          %s362 = ssub.s32 2048, 2048
          %363 = vsyncadd [#allocation9], %s362
          %s364 = sshll.u32 [#allocation10], 4
          %s365 = int_to_ptr.vmem [resolvable:$true] %s364
          %370 = dma.hbm_to_vmem [thread:$0]  %s4, 2048, %s365, [#allocation9], 128, 128, 8
        $region24: #{tpu_custom_call.1} parent=11 // pred_fallthru
          _
        // Predicated region
        $region25: #{tpu_custom_call.1} parent=11 // pred_check
          %p371 = pneg %p190
        $region26: #{tpu_custom_call.1} parent=11 // pred_check_branch
          %373 = sbr.rel (%p371) target = $region28
        $region27: #{tpu_custom_call.1} parent=11 // pred_region
          %s375 = ssub.s32 2048, 2048
          %376 = vsyncadd [#allocation12], %s375
          %s377 = sshll.u32 [#allocation11], 4
          %s378 = int_to_ptr.vmem [resolvable:$true] %s377
          %383 = dma.hbm_to_vmem [thread:$0]  %s5, 2048, %s378, [#allocation12], 128, 128, 8
        $region28: #{tpu_custom_call.1} parent=11 // pred_fallthru
          _
        // Predicated region
        $region29: #{tpu_custom_call.1} parent=11 // pred_check
          %p384 = pneg %p211
        $region30: #{tpu_custom_call.1} parent=11 // pred_check_branch
          %386 = sbr.rel (%p384) target = $region32
        $region31: #{tpu_custom_call.1} parent=11 // pred_region
          %s388 = ssub.s32 128, 128
          %389 = vsyncadd [#allocation12], %s388
          %s391 = sshll.u32 [#allocation13], 4
          %s392 = int_to_ptr.vmem [resolvable:$true] %s391
          %394 = dma.hbm_to_vmem [thread:$0]  %s6, 128, %s392, [#allocation12]
        $region32: #{tpu_custom_call.1} parent=11 // pred_fallthru
          _
      $region12: #{tpu_custom_call.1} parent=5 // pred_fallthru
        _
      %p395 = scmp.lt.s32.totalorder %s34, 4
      // Predicated region
      $region33: #{tpu_custom_call.1} parent=5 // pred_check
        %p396 = pneg %p395
      $region34: #{tpu_custom_call.1} parent=5 // pred_check_branch
        %398 = sbr.rel (%p396) target = $region36
      $region35: #{tpu_custom_call.1} parent=5 // pred_region
        // Predicated region
        $region37: #{tpu_custom_call.1} parent=35 // pred_check
          %p399 = pneg %p70
        $region38: #{tpu_custom_call.1} parent=35 // pred_check_branch
          %401 = sbr.rel (%p399) target = $region40
        $region39: #{tpu_custom_call.1} parent=35 // pred_region
          %s402 = sand.u32 %s60, 1
          %s403 = scalar_lea.sflag [#allocation3], %s402
          %s404 = sand.u32 %s60, 1
          %s405 = smul.addr %s404, 16
          %s406 = scalar_lea.vmem [#allocation2], %s405
          %s407 = smul.u32 %s41, 2
          %s408 = sadd.s32 %s407, %s42
          %s409 = smul.u32 4, %s408
          %s411 = ssub.s32 256, 256
          %412 = vsyncadd %s403, %s411
          %s413 = smul.addr %s409, 64
          %s414 = scalar_lea.hbm %s0, %s413
          %s415 = sshll.u32 %s406, 4
          %s416 = int_to_ptr.vmem [resolvable:$true] %s415
          %421 = dma.hbm_to_vmem [thread:$0]  %s414, 256, %s416, %s403, 64, 64, 4
        $region40: #{tpu_custom_call.1} parent=35 // pred_fallthru
          _
        // Predicated region
        $region41: #{tpu_custom_call.1} parent=35 // pred_check
          %p422 = pneg %p100
        $region42: #{tpu_custom_call.1} parent=35 // pred_check_branch
          %424 = sbr.rel (%p422) target = $region44
        $region43: #{tpu_custom_call.1} parent=35 // pred_region
          %s425 = sand.u32 %s34, 1
          %s426 = scalar_lea.sflag [#allocation6], %s425
          %s427 = sand.u32 %s90, 1
          %s428 = smul.addr %s427, 32
          %s429 = scalar_lea.vmem [#allocation5], %s428
          %s430 = smul.u32 %s41, 2
          %s431 = sadd.s32 %s430, %s42
          %s432 = smul.u32 4, %s431
          %s434 = ssub.s32 512, 512
          %435 = vsyncadd %s426, %s434
          %s436 = smul.addr %s432, 128
          %s437 = scalar_lea.hbm %s1, %s436
          %s438 = sshll.u32 %s429, 4
          %s439 = int_to_ptr.vmem [resolvable:$true] %s438
          %444 = dma.hbm_to_vmem [thread:$0]  %s437, 512, %s439, %s426, 128, 128, 8
        $region44: #{tpu_custom_call.1} parent=35 // pred_fallthru
          _
      $region36: #{tpu_custom_call.1} parent=5 // pred_fallthru
        _
      %p445 = scmp.le.s32.totalorder 1, %s34
      %p446 = scmp.lt.s32.totalorder %s34, 5
      %p447 = pnand %p445, %p446
      %p448 = pneg %p447
      // Predicated region
      $region45: #{tpu_custom_call.1} parent=5 // pred_check
        _
      $region46: #{tpu_custom_call.1} parent=5 // pred_check_branch
        %450 = sbr.rel (%p447) target = $region48
      $region47: #{tpu_custom_call.1} parent=5 // pred_region
        %s451 = ssub.s32 %s34, 1
        %s452 = sand.u32 %s63, 1
        %s453 = scalar_lea.sflag [#allocation3], %s452
        %s454 = sand.u32 %s63, 1
        %s455 = smul.addr %s454, 16
        %s456 = scalar_lea.vmem [#allocation2], %s455
        // Predicated region
        $region49: #{tpu_custom_call.1} parent=47 // pred_check
          %p457 = pneg %p76
        $region50: #{tpu_custom_call.1} parent=47 // pred_check_branch
          %459 = sbr.rel (%p457) target = $region52
        $region51: #{tpu_custom_call.1} parent=47 // pred_region
          %460 = dma.done %s453, 256
        $region52: #{tpu_custom_call.1} parent=47 // pred_fallthru
          _
        %s461 = sand.u32 %s39, 1
        %s462 = scalar_lea.sflag [#allocation6], %s461
        %s463 = sand.u32 %s93, 1
        %s464 = smul.addr %s463, 32
        %s465 = scalar_lea.vmem [#allocation5], %s464
        // Predicated region
        $region53: #{tpu_custom_call.1} parent=47 // pred_check
          %p466 = pneg %p106
        $region54: #{tpu_custom_call.1} parent=47 // pred_check_branch
          %468 = sbr.rel (%p466) target = $region56
        $region55: #{tpu_custom_call.1} parent=47 // pred_region
          %469 = dma.done %s462, 512
        $region56: #{tpu_custom_call.1} parent=47 // pred_fallthru
          _
        // Predicated region
        $region57: #{tpu_custom_call.1} parent=47 // pred_check
          %p470 = pneg %p127
        $region58: #{tpu_custom_call.1} parent=47 // pred_check_branch
          %472 = sbr.rel (%p470) target = $region60
        $region59: #{tpu_custom_call.1} parent=47 // pred_region
          %473 = dma.done [#allocation6], 256
        $region60: #{tpu_custom_call.1} parent=47 // pred_fallthru
          _
        // Predicated region
        $region61: #{tpu_custom_call.1} parent=47 // pred_check
          %p474 = pneg %p148
        $region62: #{tpu_custom_call.1} parent=47 // pred_check_branch
          %476 = sbr.rel (%p474) target = $region64
        $region63: #{tpu_custom_call.1} parent=47 // pred_region
          %477 = dma.done [#allocation9], 128
        $region64: #{tpu_custom_call.1} parent=47 // pred_fallthru
          _
        // Predicated region
        $region65: #{tpu_custom_call.1} parent=47 // pred_check
          %p478 = pneg %p169
        $region66: #{tpu_custom_call.1} parent=47 // pred_check_branch
          %480 = sbr.rel (%p478) target = $region68
        $region67: #{tpu_custom_call.1} parent=47 // pred_region
          %481 = dma.done [#allocation9], 2048
        $region68: #{tpu_custom_call.1} parent=47 // pred_fallthru
          _
        // Predicated region
        $region69: #{tpu_custom_call.1} parent=47 // pred_check
          %p482 = pneg %p190
        $region70: #{tpu_custom_call.1} parent=47 // pred_check_branch
          %484 = sbr.rel (%p482) target = $region72
        $region71: #{tpu_custom_call.1} parent=47 // pred_region
          %485 = dma.done [#allocation12], 2048
        $region72: #{tpu_custom_call.1} parent=47 // pred_fallthru
          _
        // Predicated region
        $region73: #{tpu_custom_call.1} parent=47 // pred_check
          %p486 = pneg %p211
        $region74: #{tpu_custom_call.1} parent=47 // pred_check_branch
          %488 = sbr.rel (%p486) target = $region76
        $region75: #{tpu_custom_call.1} parent=47 // pred_region
          %489 = dma.done [#allocation12], 128
        $region76: #{tpu_custom_call.1} parent=47 // pred_fallthru
          _
        %s490 = sand.u32 %s63, 1
        %s491 = scalar_lea.sflag [#allocation3], %s490
        %s492 = sand.u32 %s63, 1
        %s493 = smul.addr %s492, 16
        %s494 = scalar_lea.vmem [#allocation2], %s493
        %p495 = pneg %p76
        %p496 = pneg %p73
        %s497 = sand.u32 %s39, 1
        %s498 = scalar_lea.sflag [#allocation6], %s497
        %s499 = sand.u32 %s93, 1
        %s500 = smul.addr %s499, 32
        %s501 = scalar_lea.vmem [#allocation5], %s500
        %p502 = pneg %p106
        %p503 = pneg %p103
        %p504 = pneg %p127
        %p505 = pneg %p124
        %p506 = pneg %p148
        %p507 = pneg %p145
        %p508 = pneg %p169
        %p509 = pneg %p166
        %p510 = pneg %p190
        %p511 = pneg %p187
        %p512 = pneg %p211
        %p513 = pneg %p208
        %p514 = pneg %p241
        %p515 = pneg %p238
        %s516 = sand.u32 %s228, 1
        %s517 = scalar_lea.sflag [#allocation4], %s516
        %s518 = sand.u32 %s228, 1
        %s519 = smul.addr %s518, 32
        %s520 = scalar_lea.vmem [#allocation14], %s519
        %p521 = pneg %p267
        %p522 = pneg %p264
        %s523 = sand.u32 %s39, 1
        %s524 = scalar_lea.sflag [#allocation16], %s523
        %s525 = sand.u32 %s254, 1
        %s526 = smul.addr %s525, 8
        %s527 = scalar_lea.vmem [#allocation15], %s526
        %p528 = pneg %p293
        %p529 = pneg %p290
        %s530 = sand.u32 %s39, 1
        %s531 = scalar_lea.sflag [#allocation16], %s530
        %s532 = sand.u32 %s280, 1
        %s533 = smul.addr %s532, 8
        %s534 = scalar_lea.vmem [#allocation17], %s533
        %p535 = pneg %p319
        %p536 = pneg %p316
        %s537 = sand.u32 %s306, 1
        %s538 = scalar_lea.sflag [#allocation19], %s537
        %s539 = sand.u32 %s306, 1
        %s540 = smul.addr %s539, 8
        %s541 = scalar_lea.vmem [#allocation18], %s540
        %s542 = smul.u32 %s43, 2
        %s543 = sadd.s32 %s542, %s44
        %s544 = smul.u32 4, %s543
        %s545 = smul.u32 %s43, 2
        %s546 = sadd.s32 %s545, %s44
        %s547 = smul.u32 4, %s546
        %s548 = smul.u32 %s43, 2
        %s549 = sadd.s32 %s548, %s44
        %s550 = smul.u32 4, %s549
        %p552 = scmp.eq.s32.totalorder %s44, 0
        // Predicated region
        $region77: #{tpu_custom_call.1} parent=47 // pred_check
          %p553 = pneg %p552
        $region78: #{tpu_custom_call.1} parent=47 // pred_check_branch
          %555 = sbr.rel (%p553) target = $region80
        $region79: #{tpu_custom_call.1} parent=47 // pred_region
          %vm556 = vcmask 7168
          %557 = vst.msk [vmem:[%s527] sm:$0xff] %vm556, -1e+30
          %558 = vst.msk [vmem:[%s534] sm:$0xff] %vm556, 0.0
          %559 = vst [vmem:[%s541] sm:$0xff] 0.0
        $region80: #{tpu_custom_call.1} parent=47 // pred_fallthru
          _
        %v560 = vld [vmem:[%s456] sm:$0xf]
        %v561 = vld [vmem:[%s456 + $0x4] sm:$0xf]
        %v562 = vld [vmem:[%s456 + $0x8] sm:$0xf]
        %v563 = vld [vmem:[%s456 + $0xc] sm:$0xf]
        %v564 = vld [vmem:[#allocation7] sm:$0xf]
        %v565 = vld [vmem:[#allocation7 + $0x4] sm:$0xf]
        %v566 = vld [vmem:[#allocation7 + $0x8] sm:$0xf]
        %v567 = vld [vmem:[#allocation7 + $0xc] sm:$0xf]
        %v568 = vld [vmem:[#allocation8] sm:$0x1f]
        %v569 = vlaneseq
        %v570 = vshrl.u32 %v569, 7
        %v571 = vsub.s32 0, %v570
        %v572 = vrot.slane %v568, %v571
        %v577 = vunpack.c.l.b16 %v560
        %v578 = vunpack.c.l.b16 %v561
        %v579 = vunpack.c.l.b16 %v562
        %v580 = vunpack.c.l.b16 %v563
        %v581 = vpack.c.b16 %v578, %v577
        %v582 = vpack.c.b16 %v580, %v579
        %v587 = vunpack.c.l.b16 %v564
        %v588 = vunpack.c.l.b16 %v565
        %v589 = vunpack.c.l.b16 %v566
        %v590 = vunpack.c.l.b16 %v567
        %v591 = vpack.c.b16 %v588, %v587
        %v592 = vpack.c.b16 %v590, %v589
        %vm595 = vcmask 261120
        %v597 = vsel %vm595, %v581, 0
        %v600 = vsel %vm595, %v582, 0
        %602 = vmatprep.subr.bf16.mxu0 0
        %603 = vmatpush1.bf16.msra.mxu0 %v591
        %604 = vmatprep.subr.bf16.mxu0 0
        %605 = vmatpush1.bf16.msra.mxu0 %v592
        %606 = vmatprep.subr.bf16.mxu0 0
        %607 = vmatpush1.bf16.msra.mxu0 0
        %608 = vmatprep.subr.bf16.mxu0 0
        %609 = vmatpush1.bf16.msra.mxu0 0
        %610 = vmatprep.subr.bf16.mxu0 0
        %611 = vmatpush1.bf16.msra.mxu0 0
        %612 = vmatprep.subr.bf16.mxu0 0
        %613 = vmatpush1.bf16.msra.mxu0 0
        %614 = vmatprep.subr.bf16.mxu0 0
        %615 = vmatpush1.bf16.msra.mxu0 0
        %616 = vmatprep.subr.bf16.mxu0 0
        %617 = vmatpush1.bf16.msra.mxu0 0
        %618 = vmatprep.subr.bf16.mxu0 0
        %619 = vmatpush1.bf16.msra.mxu0 0
        %620 = vmatprep.subr.bf16.mxu0 0
        %621 = vmatpush1.bf16.msra.mxu0 0
        %622 = vmatprep.subr.bf16.mxu0 0
        %623 = vmatpush1.bf16.msra.mxu0 0
        %624 = vmatprep.subr.bf16.mxu0 0
        %625 = vmatpush1.bf16.msra.mxu0 0
        %626 = vmatprep.subr.bf16.mxu0 0
        %627 = vmatpush1.bf16.msra.mxu0 0
        %628 = vmatprep.subr.bf16.mxu0 0
        %629 = vmatpush1.bf16.msra.mxu0 0
        %630 = vmatprep.subr.bf16.mxu0 0
        %631 = vmatpush1.bf16.msra.mxu0 0
        %632 = vmatprep.subr.bf16.mxu0 0
        %633 = vmatpush1.bf16.msra.mxu0 0
        %634 = vmatprep.mubr.bf16.mxu0 0
        %635 = vmatmul.mubr.bf16.gmra.mrb[0].mxu0 %v597
        %v636 = vpop.f32.mrb[0].mxu0
        %v637 = vadd.f32 %v572, %v636
        %v638 = vpop.f32.mrb[0].mxu0
        %v639 = vpop.f32.mrb[0].mxu0
        %v640 = vadd.f32 %v572, %v639
        %v641 = vpop.f32.mrb[0].mxu0
        %642 = vmatprep.mubr.bf16.mxu0 0
        %643 = vmatmul.mubr.bf16.gmra.mrb[0].mxu0 %v600
        %v644 = vpop.f32.mrb[0].mxu0
        %v645 = vadd.f32 %v572, %v644
        %v646 = vpop.f32.mrb[0].mxu0
        %v647 = vpop.f32.mrb[0].mxu0
        %v648 = vadd.f32 %v572, %v647
        %v649 = vpop.f32.mrb[0].mxu0
        %650 = vdwg.mxu0
        %651 = vadd.xlane.f32.xlu0 %v637
        %v652 = vpop.xlane.xlu0 %651
        %653 = vadd.xlane.f32.xlu0 %v640
        %v654 = vpop.xlane.xlu0 %653
        %655 = vadd.xlane.f32.xlu0 %v645
        %v656 = vpop.xlane.xlu0 %655
        %657 = vadd.xlane.f32.xlu0 %v648
        %v658 = vpop.xlane.xlu0 %657
        %v659 = vmul.f32 %v652, 0.03125
        %v660 = vmul.f32 %v654, 0.03125
        %v661 = vmul.f32 %v656, 0.03125
        %v662 = vmul.f32 %v658, 0.03125
        %v663 = vlaneseq
        %v664 = vshrl.u32 %v663, 7
        %v665 = vsub.s32 4, %v664
        %v666 = vrot.slane %v568, %v665
        %v667 = vmul.f32 %v659, %v666
        %v668 = vmul.f32 %v660, %v666
        %v669 = vmul.f32 %v661, %v666
        %v670 = vmul.f32 %v662, %v666
        %v671 = vsub.f32 %v637, %v667
        %v672 = vsub.f32 %v640, %v668
        %v673 = vsub.f32 %v645, %v669
        %v674 = vsub.f32 %v648, %v670
        %v675 = vmul.f32 %v671, %v671
        %v676 = vmul.f32 %v672, %v672
        %v677 = vmul.f32 %v673, %v673
        %v678 = vmul.f32 %v674, %v674
        %679 = vadd.xlane.f32.xlu0 %v675
        %v680 = vpop.xlane.xlu0 %679
        %681 = vadd.xlane.f32.xlu0 %v676
        %v682 = vpop.xlane.xlu0 %681
        %683 = vadd.xlane.f32.xlu0 %v677
        %v684 = vpop.xlane.xlu0 %683
        %685 = vadd.xlane.f32.xlu0 %v678
        %v686 = vpop.xlane.xlu0 %685
        %v687 = vmul.f32 %v680, 0.03125
        %v688 = vmul.f32 %v682, 0.03125
        %v689 = vmul.f32 %v684, 0.03125
        %v690 = vmul.f32 %v686, 0.03125
        %v691 = vadd.f32 %v687, 1e-05
        %v692 = vadd.f32 %v688, 1e-05
        %v693 = vadd.f32 %v689, 1e-05
        %v694 = vadd.f32 %v690, 1e-05
        %v695 = vrsqrt.pop %v691
        %v696 = vrsqrt.pop %v692
        %v697 = vrsqrt.pop %v693
        %v698 = vrsqrt.pop %v694
        %v699 = vmul.f32 %v671, %v695
        %v700 = vmul.f32 %v672, %v696
        %v701 = vmul.f32 %v673, %v697
        %v702 = vmul.f32 %v674, %v698
        %v703 = vlaneseq
        %v704 = vshrl.u32 %v703, 7
        %v705 = vsub.s32 1, %v704
        %v706 = vrot.slane %v568, %v705
        %v707 = vmul.f32 %v699, %v706
        %v708 = vmul.f32 %v700, %v706
        %v709 = vmul.f32 %v701, %v706
        %v710 = vmul.f32 %v702, %v706
        %v711 = vlaneseq
        %v712 = vshrl.u32 %v711, 7
        %v713 = vsub.s32 2, %v712
        %v714 = vrot.slane %v568, %v713
        %v715 = vadd.f32 %v707, %v714
        %v716 = vadd.f32 %v708, %v714
        %v717 = vadd.f32 %v709, %v714
        %v718 = vadd.f32 %v710, %v714
        %vm719 = vcmp.gt.f32.partialorder %v715, 0.0
        %vm720 = vcmp.gt.f32.partialorder %v716, 0.0
        %vm721 = vcmp.gt.f32.partialorder %v717, 0.0
        %vm722 = vcmp.gt.f32.partialorder %v718, 0.0
        %v723 = vlaneseq
        %v724 = vshrl.u32 %v723, 7
        %v725 = vsub.s32 3, %v724
        %v726 = vrot.slane %v568, %v725
        %v727 = vmul.f32 %v726, %v715
        %v728 = vmul.f32 %v726, %v716
        %v729 = vmul.f32 %v726, %v717
        %v730 = vmul.f32 %v726, %v718
        %v731 = vsel %vm719, %v715, %v727
        %v732 = vsel %vm720, %v716, %v728
        %v733 = vsel %vm721, %v717, %v729
        %v734 = vsel %vm722, %v718, %v730
        %735 = vst.msk [vmem:[%s520] sm:$0xff] %vm595, %v731
        %736 = vst.msk [vmem:[%s520 + $0x8] sm:$0xff] %vm595, %v732
        %737 = vst.msk [vmem:[%s520 + $0x10] sm:$0xff] %vm595, %v733
        %738 = vst.msk [vmem:[%s520 + $0x18] sm:$0xff] %vm595, %v734
        %v739 = vpack.c.bf16 %v732, %v731
        %v740 = vpack.c.bf16 %v734, %v733
        %v741 = vld [vmem:[#allocation10] sm:$0xff]
        %v742 = vld [vmem:[#allocation10 + $0x8] sm:$0xff]
        %v743 = vld [vmem:[#allocation10 + $0x10] sm:$0xff]
        %v744 = vld [vmem:[#allocation10 + $0x18] sm:$0xff]
        %v745 = vld [vmem:[#allocation10 + $0x20] sm:$0xff]
        %v746 = vld [vmem:[#allocation10 + $0x28] sm:$0xff]
        %v747 = vld [vmem:[#allocation10 + $0x30] sm:$0xff]
        %v748 = vld [vmem:[#allocation10 + $0x38] sm:$0xff]
        %v749 = vld [vmem:[#allocation10 + $0x40] sm:$0xff]
        %v750 = vld [vmem:[#allocation10 + $0x48] sm:$0xff]
        %v751 = vld [vmem:[#allocation10 + $0x50] sm:$0xff]
        %v752 = vld [vmem:[#allocation10 + $0x58] sm:$0xff]
        %v753 = vld [vmem:[#allocation10 + $0x60] sm:$0xff]
        %v754 = vld [vmem:[#allocation10 + $0x68] sm:$0xff]
        %v755 = vld [vmem:[#allocation10 + $0x70] sm:$0xff]
        %v756 = vld [vmem:[#allocation10 + $0x78] sm:$0xff]
        %v773 = vunpack.c.l.b16 %v741
        %v774 = vunpack.c.h.b16 %v741
        %v775 = vunpack.c.l.b16 %v742
        %v776 = vunpack.c.h.b16 %v742
        %v777 = vunpack.c.l.b16 %v743
        %v778 = vunpack.c.h.b16 %v743
        %v779 = vunpack.c.l.b16 %v744
        %v780 = vunpack.c.h.b16 %v744
        %v781 = vunpack.c.l.b16 %v745
        %v782 = vunpack.c.h.b16 %v745
        %v783 = vunpack.c.l.b16 %v746
        %v784 = vunpack.c.h.b16 %v746
        %v785 = vunpack.c.l.b16 %v747
        %v786 = vunpack.c.h.b16 %v747
        %v787 = vunpack.c.l.b16 %v748
        %v788 = vunpack.c.h.b16 %v748
        %v789 = vunpack.c.l.b16 %v749
        %v790 = vunpack.c.h.b16 %v749
        %v791 = vunpack.c.l.b16 %v750
        %v792 = vunpack.c.h.b16 %v750
        %v793 = vunpack.c.l.b16 %v751
        %v794 = vunpack.c.h.b16 %v751
        %v795 = vunpack.c.l.b16 %v752
        %v796 = vunpack.c.h.b16 %v752
        %v797 = vunpack.c.l.b16 %v753
        %v798 = vunpack.c.h.b16 %v753
        %v799 = vunpack.c.l.b16 %v754
        %v800 = vunpack.c.h.b16 %v754
        %v801 = vunpack.c.l.b16 %v755
        %v802 = vunpack.c.h.b16 %v755
        %v803 = vunpack.c.l.b16 %v756
        %v804 = vunpack.c.h.b16 %v756
        %v805 = vpack.c.b16 %v775, %v773
        %v806 = vpack.c.b16 %v776, %v774
        %v807 = vpack.c.b16 %v779, %v777
        %v808 = vpack.c.b16 %v780, %v778
        %v809 = vpack.c.b16 %v783, %v781
        %v810 = vpack.c.b16 %v784, %v782
        %v811 = vpack.c.b16 %v787, %v785
        %v812 = vpack.c.b16 %v788, %v786
        %v813 = vpack.c.b16 %v791, %v789
        %v814 = vpack.c.b16 %v792, %v790
        %v815 = vpack.c.b16 %v795, %v793
        %v816 = vpack.c.b16 %v796, %v794
        %v817 = vpack.c.b16 %v799, %v797
        %v818 = vpack.c.b16 %v800, %v798
        %v819 = vpack.c.b16 %v803, %v801
        %v820 = vpack.c.b16 %v804, %v802
        %837 = vmatprep.subr.bf16.mxu0 %v806
        %838 = vmatpush1.bf16.msra.mxu0 %v805
        %839 = vmatprep.subr.bf16.mxu0 %v808
        %840 = vmatpush1.bf16.msra.mxu0 %v807
        %841 = vmatprep.subr.bf16.mxu0 %v810
        %842 = vmatpush1.bf16.msra.mxu0 %v809
        %843 = vmatprep.subr.bf16.mxu0 %v812
        %844 = vmatpush1.bf16.msra.mxu0 %v811
        %845 = vmatprep.subr.bf16.mxu0 %v814
        %846 = vmatpush1.bf16.msra.mxu0 %v813
        %847 = vmatprep.subr.bf16.mxu0 %v816
        %848 = vmatpush1.bf16.msra.mxu0 %v815
        %849 = vmatprep.subr.bf16.mxu0 %v818
        %850 = vmatpush1.bf16.msra.mxu0 %v817
        %851 = vmatprep.subr.bf16.mxu0 %v820
        %852 = vmatpush1.bf16.msra.mxu0 %v819
        %853 = vmatprep.subr.bf16.mxu0 0
        %854 = vmatpush1.bf16.msra.mxu0 0
        %855 = vmatprep.subr.bf16.mxu0 0
        %856 = vmatpush1.bf16.msra.mxu0 0
        %857 = vmatprep.subr.bf16.mxu0 0
        %858 = vmatpush1.bf16.msra.mxu0 0
        %859 = vmatprep.subr.bf16.mxu0 0
        %860 = vmatpush1.bf16.msra.mxu0 0
        %861 = vmatprep.subr.bf16.mxu0 0
        %862 = vmatpush1.bf16.msra.mxu0 0
        %863 = vmatprep.subr.bf16.mxu0 0
        %864 = vmatpush1.bf16.msra.mxu0 0
        %865 = vmatprep.subr.bf16.mxu0 0
        %866 = vmatpush1.bf16.msra.mxu0 0
        %867 = vmatprep.subr.bf16.mxu0 0
        %868 = vmatpush1.bf16.msra.mxu0 0
        %869 = vmatprep.mubr.bf16.mxu0 0
        %870 = vmatmul.mubr.bf16.gmra.mrb[0].mxu0 %v739
        %v871 = vpop.f32.mrb[0].mxu0
        %v872 = vadd.f32 0.0, %v871
        %v873 = vpop.f32.mrb[0].mxu0
        %v874 = vadd.f32 0.0, %v873
        %v875 = vpop.f32.mrb[0].mxu0
        %v876 = vadd.f32 0.0, %v875
        %v877 = vpop.f32.mrb[0].mxu0
        %v878 = vadd.f32 0.0, %v877
        %879 = vmatprep.mubr.bf16.mxu0 0
        %880 = vmatmul.mubr.bf16.gmra.mrb[0].mxu0 %v740
        %v881 = vpop.f32.mrb[0].mxu0
        %v882 = vadd.f32 0.0, %v881
        %v883 = vpop.f32.mrb[0].mxu0
        %v884 = vadd.f32 0.0, %v883
        %v885 = vpop.f32.mrb[0].mxu0
        %v886 = vadd.f32 0.0, %v885
        %v887 = vpop.f32.mrb[0].mxu0
        %v888 = vadd.f32 0.0, %v887
        %889 = vdwg.mxu0
        %v890 = vtanh.pop %v872
        %v891 = vtanh.pop %v876
        %v892 = vtanh.pop %v882
        %v893 = vtanh.pop %v886
        %v894 = vxor.u32 %v874, 2147483648
        %v895 = vxor.u32 %v878, 2147483648
        %v896 = vxor.u32 %v884, 2147483648
        %v897 = vxor.u32 %v888, 2147483648
        %v898 = vmul.f32 %v894, 1.442695
        %v899 = vpow.pop %v898
        %v900 = vmul.f32 %v895, 1.442695
        %v901 = vpow.pop %v900
        %v902 = vmul.f32 %v896, 1.442695
        %v903 = vpow.pop %v902
        %v904 = vmul.f32 %v897, 1.442695
        %v905 = vpow.pop %v904
        %v906 = vadd.f32 %v899, 1.0
        %v907 = vadd.f32 %v901, 1.0
        %v908 = vadd.f32 %v903, 1.0
        %v909 = vadd.f32 %v905, 1.0
        %v910 = vrcp.pop %v906
        %v911 = vmul.f32 1.0, %v910
        %v912 = vrcp.pop %v907
        %v913 = vmul.f32 1.0, %v912
        %v914 = vrcp.pop %v908
        %v915 = vmul.f32 1.0, %v914
        %v916 = vrcp.pop %v909
        %v917 = vmul.f32 1.0, %v916
        %v918 = vmul.f32 %v890, %v911
        %v919 = vmul.f32 %v891, %v913
        %v920 = vmul.f32 %v892, %v915
        %v921 = vmul.f32 %v893, %v917
        %v922 = vld [vmem:[#allocation11] sm:$0xff]
        %v923 = vld [vmem:[#allocation11 + $0x8] sm:$0xff]
        %v924 = vld [vmem:[#allocation11 + $0x10] sm:$0xff]
        %v925 = vld [vmem:[#allocation11 + $0x18] sm:$0xff]
        %v926 = vld [vmem:[#allocation11 + $0x20] sm:$0xff]
        %v927 = vld [vmem:[#allocation11 + $0x28] sm:$0xff]
        %v928 = vld [vmem:[#allocation11 + $0x30] sm:$0xff]
        %v929 = vld [vmem:[#allocation11 + $0x38] sm:$0xff]
        %v930 = vld [vmem:[#allocation11 + $0x40] sm:$0xff]
        %v931 = vld [vmem:[#allocation11 + $0x48] sm:$0xff]
        %v932 = vld [vmem:[#allocation11 + $0x50] sm:$0xff]
        %v933 = vld [vmem:[#allocation11 + $0x58] sm:$0xff]
        %v934 = vld [vmem:[#allocation11 + $0x60] sm:$0xff]
        %v935 = vld [vmem:[#allocation11 + $0x68] sm:$0xff]
        %v936 = vld [vmem:[#allocation11 + $0x70] sm:$0xff]
        %v937 = vld [vmem:[#allocation11 + $0x78] sm:$0xff]
        %938 = vmatprep.subr.mxu0 0.0
        %939 = vmatpush1.msra.mxu0 %v922
        %940 = vmatprep.subr.mxu0 0.0
        %941 = vmatpush1.msra.mxu0 %v923
        %942 = vmatprep.subr.mxu0 0.0
        %943 = vmatpush1.msra.mxu0 %v924
        %944 = vmatprep.subr.mxu0 0.0
        %945 = vmatpush1.msra.mxu0 %v925
        %946 = vmatprep.subr.mxu0 0.0
        %947 = vmatpush1.msra.mxu0 %v926
        %948 = vmatprep.subr.mxu0 0.0
        %949 = vmatpush1.msra.mxu0 %v927
        %950 = vmatprep.subr.mxu0 0.0
        %951 = vmatpush1.msra.mxu0 %v928
        %952 = vmatprep.subr.mxu0 0.0
        %953 = vmatpush1.msra.mxu0 %v929
        %954 = vmatprep.subr.mxu0 0.0
        %955 = vmatpush1.msra.mxu0 %v930
        %956 = vmatprep.subr.mxu0 0.0
        %957 = vmatpush1.msra.mxu0 %v931
        %958 = vmatprep.subr.mxu0 0.0
        %959 = vmatpush1.msra.mxu0 %v932
        %960 = vmatprep.subr.mxu0 0.0
        %961 = vmatpush1.msra.mxu0 %v933
        %962 = vmatprep.subr.mxu0 0.0
        %963 = vmatpush1.msra.mxu0 %v934
        %964 = vmatprep.subr.mxu0 0.0
        %965 = vmatpush1.msra.mxu0 %v935
        %966 = vmatprep.subr.mxu0 0.0
        %967 = vmatpush1.msra.mxu0 %v936
        %968 = vmatprep.subr.mxu0 0.0
        %969 = vmatpush1.msra.mxu0 %v937
        %970 = vmatprep.subr.mxu0 0.0
        %971 = vmatpush1.msra.mxu0 0.0
        %972 = vmatprep.subr.mxu0 0.0
        %973 = vmatpush1.msra.mxu0 0.0
        %974 = vmatprep.subr.mxu0 0.0
        %975 = vmatpush1.msra.mxu0 0.0
        %976 = vmatprep.subr.mxu0 0.0
        %977 = vmatpush1.msra.mxu0 0.0
        %978 = vmatprep.subr.mxu0 0.0
        %979 = vmatpush1.msra.mxu0 0.0
        %980 = vmatprep.subr.mxu0 0.0
        %981 = vmatpush1.msra.mxu0 0.0
        %982 = vmatprep.subr.mxu0 0.0
        %983 = vmatpush1.msra.mxu0 0.0
        %984 = vmatprep.subr.mxu0 0.0
        %985 = vmatpush1.msra.mxu0 0.0
        %986 = vmatprep.subr.mxu0 0.0
        %987 = vmatpush1.msra.mxu0 0.0
        %988 = vmatprep.subr.mxu0 0.0
        %989 = vmatpush1.msra.mxu0 0.0
        %990 = vmatprep.subr.mxu0 0.0
        %991 = vmatpush1.msra.mxu0 0.0
        %992 = vmatprep.subr.mxu0 0.0
        %993 = vmatpush1.msra.mxu0 0.0
        %994 = vmatprep.subr.mxu0 0.0
        %995 = vmatpush1.msra.mxu0 0.0
        %996 = vmatprep.subr.mxu0 0.0
        %997 = vmatpush1.msra.mxu0 0.0
        %998 = vmatprep.subr.mxu0 0.0
        %999 = vmatpush1.msra.mxu0 0.0
        %1000 = vmatprep.subr.mxu0 0.0
        %1001 = vmatpush1.msra.mxu0 0.0
        %1002 = vmatprep.mubr.f32.mxu0 0.0
        %1003 = vmatmul.mubr.f32.gmra.mrb[0].mxu0 %v918
        %v1004 = vpop.f32.mrb[0].mxu0
        %v1005 = vadd.f32 0.0, %v1004
        %v1006 = vpop.f32.mrb[0].mxu0
        %1007 = vmatprep.mubr.f32.mxu0 0.0
        %1008 = vmatmul.mubr.f32.gmra.mrb[0].mxu0 %v919
        %v1009 = vpop.f32.mrb[0].mxu0
        %v1010 = vadd.f32 0.0, %v1009
        %v1011 = vpop.f32.mrb[0].mxu0
        %1012 = vmatprep.mubr.f32.mxu0 0.0
        %1013 = vmatmul.mubr.f32.gmra.mrb[0].mxu0 %v920
        %v1014 = vpop.f32.mrb[0].mxu0
        %v1015 = vadd.f32 0.0, %v1014
        %v1016 = vpop.f32.mrb[0].mxu0
        %1017 = vmatprep.mubr.f32.mxu0 0.0
        %1018 = vmatmul.mubr.f32.gmra.mrb[0].mxu0 %v921
        %v1019 = vpop.f32.mrb[0].mxu0
        %v1020 = vadd.f32 0.0, %v1019
        %v1021 = vpop.f32.mrb[0].mxu0
        %1022 = vdwg.mxu0
        %v1023 = vlaneseq
        %v1024 = vand.u32 %v1023, 127
        %v1025 = vld [vmem:[%s465] sm:$0xff]
        %v1026 = vld [vmem:[%s465 + $0x8] sm:$0xff]
        %v1027 = vld [vmem:[%s465 + $0x10] sm:$0xff]
        %v1028 = vld [vmem:[%s465 + $0x18] sm:$0xff]
        %1029 = vset.pattern.permute.xlu0 0
        %1030 = vperm.xlu0 %1029, %v1025
        %v1031 = vpop.permute.xlu0 %1030
        %1032 = vset.pattern.permute.xlu0 0
        %1033 = vperm.xlu0 %1032, %v1026
        %v1034 = vpop.permute.xlu0 %1033
        %1035 = vset.pattern.permute.xlu0 0
        %1036 = vperm.xlu0 %1035, %v1027
        %v1037 = vpop.permute.xlu0 %1036
        %1038 = vset.pattern.permute.xlu0 0
        %1039 = vperm.xlu0 %1038, %v1028
        %v1040 = vpop.permute.xlu0 %1039
        %vm1041 = vcmp.eq.s32.totalorder %v1031, %v1024
        %vm1042 = vcmp.eq.s32.totalorder %v1034, %v1024
        %vm1043 = vcmp.eq.s32.totalorder %v1037, %v1024
        %vm1044 = vcmp.eq.s32.totalorder %v1040, %v1024
        %v1045 = vsel %vm1041, 1, 0
        %v1046 = vsel %vm1042, 1, 0
        %v1047 = vsel %vm1043, 1, 0
        %v1048 = vsel %vm1044, 1, 0
        %v1049 = vcvt.s32.f32 %v1045
        %v1050 = vcvt.s32.f32 %v1046
        %v1051 = vcvt.s32.f32 %v1047
        %v1052 = vcvt.s32.f32 %v1048
        %vm1053 = vcmp.gt.f32.partialorder %v1049, 0.0
        %vm1054 = vcmp.gt.f32.partialorder %v1050, 0.0
        %vm1055 = vcmp.gt.f32.partialorder %v1051, 0.0
        %vm1056 = vcmp.gt.f32.partialorder %v1052, 0.0
        %1058 = vset.pattern.permute.xlu0 0
        %1059 = vperm.xlu0 %1058, %v1005
        %v1060 = vpop.permute.xlu0 %1059
        %1063 = vset.pattern.permute.xlu0 0
        %1064 = vperm.xlu0 %1063, %v1010
        %v1065 = vpop.permute.xlu0 %1064
        %1068 = vset.pattern.permute.xlu0 0
        %1069 = vperm.xlu0 %1068, %v1015
        %v1070 = vpop.permute.xlu0 %1069
        %1073 = vset.pattern.permute.xlu0 0
        %1074 = vperm.xlu0 %1073, %v1020
        %v1075 = vpop.permute.xlu0 %1074
        %v1077 = vsel %vm1053, %v1060, -1e+30
        %v1078 = vsel %vm1054, %v1065, -1e+30
        %v1079 = vsel %vm1055, %v1070, -1e+30
        %v1080 = vsel %vm1056, %v1075, -1e+30
        %vm1081 = vcmask 64512
        %v1082 = vsel %vm1081, %v1077, -inf
        %v1083 = vsel %vm1081, %v1078, -inf
        %v1084 = vsel %vm1081, %v1079, -inf
        %v1085 = vsel %vm1081, %v1080, -inf
        %v1086 = vmax.f32 %v1082, %v1083
        %v1087 = vmax.f32 %v1084, %v1085
        %v1088 = vmax.f32 %v1086, %v1087
        %v1089 = vrot.slane %v1088, 4
        %v1090 = vmax.f32 %v1088, %v1089
        %v1091 = vrot.slane %v1090, 2
        %v1092 = vmax.f32 %v1090, %v1091
        %v1093 = vrot.slane %v1092, 1
        %v1094 = vmax.f32 %v1092, %v1093
        %v1095 = vld [vmem:[#allocation13] sm:$0xff]
        %v1096 = vmul.f32 %v1095, %v1094
        %v1097 = vsel %vm1081, %v1096, 0.0
        %1098 = vadd.xlane.f32.xlu0 %v1097
        %v1099 = vpop.xlane.xlu0 %1098
        %v1100 = vld [vmem:[%s527] sm:$0xff]
        %v1101 = vmax.f32 %v1100, %v1099
        %v1102 = vsub.f32 %v1100, %v1101
        %v1103 = vmul.f32 %v1102, 1.442695
        %v1104 = vpow.pop %v1103
        %v1106 = vsel %vm1081, %v1049, 0
        %v1109 = vsel %vm1081, %v1050, 0
        %v1112 = vsel %vm1081, %v1051, 0
        %v1115 = vsel %vm1081, %v1052, 0
        %1117 = vmatprep.subr.mxu0 0.0
        %1118 = vmatpush1.msra.mxu0 %v1101
        %1119 = vmatprep.subr.mxu0 0.0
        %1120 = vmatpush1.msra.mxu0 0.0
        %1121 = vmatprep.subr.mxu0 0.0
        %1122 = vmatpush1.msra.mxu0 0.0
        %1123 = vmatprep.subr.mxu0 0.0
        %1124 = vmatpush1.msra.mxu0 0.0
        %1125 = vmatprep.subr.mxu0 0.0
        %1126 = vmatpush1.msra.mxu0 0.0
        %1127 = vmatprep.subr.mxu0 0.0
        %1128 = vmatpush1.msra.mxu0 0.0
        %1129 = vmatprep.subr.mxu0 0.0
        %1130 = vmatpush1.msra.mxu0 0.0
        %1131 = vmatprep.subr.mxu0 0.0
        %1132 = vmatpush1.msra.mxu0 0.0
        %1133 = vmatprep.subr.mxu0 0.0
        %1134 = vmatpush1.msra.mxu0 0.0
        %1135 = vmatprep.subr.mxu0 0.0
        %1136 = vmatpush1.msra.mxu0 0.0
        %1137 = vmatprep.subr.mxu0 0.0
        %1138 = vmatpush1.msra.mxu0 0.0
        %1139 = vmatprep.subr.mxu0 0.0
        %1140 = vmatpush1.msra.mxu0 0.0
        %1141 = vmatprep.subr.mxu0 0.0
        %1142 = vmatpush1.msra.mxu0 0.0
        %1143 = vmatprep.subr.mxu0 0.0
        %1144 = vmatpush1.msra.mxu0 0.0
        %1145 = vmatprep.subr.mxu0 0.0
        %1146 = vmatpush1.msra.mxu0 0.0
        %1147 = vmatprep.subr.mxu0 0.0
        %1148 = vmatpush1.msra.mxu0 0.0
        %1149 = vmatprep.subr.mxu0 0.0
        %1150 = vmatpush1.msra.mxu0 0.0
        %1151 = vmatprep.subr.mxu0 0.0
        %1152 = vmatpush1.msra.mxu0 0.0
        %1153 = vmatprep.subr.mxu0 0.0
        %1154 = vmatpush1.msra.mxu0 0.0
        %1155 = vmatprep.subr.mxu0 0.0
        %1156 = vmatpush1.msra.mxu0 0.0
        %1157 = vmatprep.subr.mxu0 0.0
        %1158 = vmatpush1.msra.mxu0 0.0
        %1159 = vmatprep.subr.mxu0 0.0
        %1160 = vmatpush1.msra.mxu0 0.0
        %1161 = vmatprep.subr.mxu0 0.0
        %1162 = vmatpush1.msra.mxu0 0.0
        %1163 = vmatprep.subr.mxu0 0.0
        %1164 = vmatpush1.msra.mxu0 0.0
        %1165 = vmatprep.subr.mxu0 0.0
        %1166 = vmatpush1.msra.mxu0 0.0
        %1167 = vmatprep.subr.mxu0 0.0
        %1168 = vmatpush1.msra.mxu0 0.0
        %1169 = vmatprep.subr.mxu0 0.0
        %1170 = vmatpush1.msra.mxu0 0.0
        %1171 = vmatprep.subr.mxu0 0.0
        %1172 = vmatpush1.msra.mxu0 0.0
        %1173 = vmatprep.subr.mxu0 0.0
        %1174 = vmatpush1.msra.mxu0 0.0
        %1175 = vmatprep.subr.mxu0 0.0
        %1176 = vmatpush1.msra.mxu0 0.0
        %1177 = vmatprep.subr.mxu0 0.0
        %1178 = vmatpush1.msra.mxu0 0.0
        %1179 = vmatprep.subr.mxu0 0.0
        %1180 = vmatpush1.msra.mxu0 0.0
        %1181 = vmatprep.mubr.f32.mxu0 0.0
        %1182 = vmatmul.mubr.f32.gmra.mrb[0].mxu0 %v1106
        %v1183 = vpop.f32.mrb[0].mxu0
        %v1184 = vadd.f32 0.0, %v1183
        %v1185 = vpop.f32.mrb[0].mxu0
        %1186 = vmatprep.mubr.f32.mxu0 0.0
        %1187 = vmatmul.mubr.f32.gmra.mrb[0].mxu0 %v1109
        %v1188 = vpop.f32.mrb[0].mxu0
        %v1189 = vadd.f32 0.0, %v1188
        %v1190 = vpop.f32.mrb[0].mxu0
        %1191 = vmatprep.mubr.f32.mxu0 0.0
        %1192 = vmatmul.mubr.f32.gmra.mrb[0].mxu0 %v1112
        %v1193 = vpop.f32.mrb[0].mxu0
        %v1194 = vadd.f32 0.0, %v1193
        %v1195 = vpop.f32.mrb[0].mxu0
        %1196 = vmatprep.mubr.f32.mxu0 0.0
        %1197 = vmatmul.mubr.f32.gmra.mrb[0].mxu0 %v1115
        %v1198 = vpop.f32.mrb[0].mxu0
        %v1199 = vadd.f32 0.0, %v1198
        %v1200 = vpop.f32.mrb[0].mxu0
        %1201 = vdwg.mxu0
        %v1202 = vsub.f32 %v1005, %v1184
        %v1203 = vsub.f32 %v1010, %v1189
        %v1204 = vsub.f32 %v1015, %v1194
        %v1205 = vsub.f32 %v1020, %v1199
        %v1206 = vmin.f32 %v1202, 0.0
        %v1207 = vmin.f32 %v1203, 0.0
        %v1208 = vmin.f32 %v1204, 0.0
        %v1209 = vmin.f32 %v1205, 0.0
        %v1210 = vmul.f32 %v1206, 1.442695
        %v1211 = vpow.pop %v1210
        %v1212 = vmul.f32 %v1207, 1.442695
        %v1213 = vpow.pop %v1212
        %v1214 = vmul.f32 %v1208, 1.442695
        %v1215 = vpow.pop %v1214
        %v1216 = vmul.f32 %v1209, 1.442695
        %v1217 = vpow.pop %v1216
        %1219 = vset.pattern.permute.xlu0 0
        %1220 = vperm.xlu0 %1219, %v1211
        %v1221 = vpop.permute.xlu0 %1220
        %1224 = vset.pattern.permute.xlu0 0
        %1225 = vperm.xlu0 %1224, %v1213
        %v1226 = vpop.permute.xlu0 %1225
        %1229 = vset.pattern.permute.xlu0 0
        %1230 = vperm.xlu0 %1229, %v1215
        %v1231 = vpop.permute.xlu0 %1230
        %1234 = vset.pattern.permute.xlu0 0
        %1235 = vperm.xlu0 %1234, %v1217
        %v1236 = vpop.permute.xlu0 %1235
        %v1238 = vmul.f32 %v1049, %v1221
        %v1239 = vmul.f32 %v1050, %v1226
        %v1240 = vmul.f32 %v1051, %v1231
        %v1241 = vmul.f32 %v1052, %v1236
        %1242 = vxpose.xlu0.b32.start [1/16] %v1238, 128
        %1243 = vxpose.xlu0.b32.cont [2/16] %v1239, 128
        %1244 = vxpose.xlu0.b32.cont [3/16] %v1240, 128
        %1245 = vxpose.xlu0.b32.cont [4/16] %v1241, 128
        %1246 = vxpose.xlu0.b32.cont [5/16] 0.0, 128
        %1247 = vxpose.xlu0.b32.cont [6/16] 0.0, 128
        %1248 = vxpose.xlu0.b32.cont [7/16] 0.0, 128
        %1249 = vxpose.xlu0.b32.cont [8/16] 0.0, 128
        %1250 = vxpose.xlu0.b32.cont [9/16] 0.0, 128
        %1251 = vxpose.xlu0.b32.cont [10/16] 0.0, 128
        %1252 = vxpose.xlu0.b32.cont [11/16] 0.0, 128
        %1253 = vxpose.xlu0.b32.cont [12/16] 0.0, 128
        %1254 = vxpose.xlu0.b32.cont [13/16] 0.0, 128
        %1255 = vxpose.xlu0.b32.cont [14/16] 0.0, 128
        %1256 = vxpose.xlu0.b32.cont [15/16] 0.0, 128
        %1257 = vxpose.xlu0.b32.end [16/16] 0.0, 128
        %v1258 = vpop.trf.xlu0
        %v1259 = vpop.trf.xlu0
        %v1260 = vpop.trf.xlu0
        %v1261 = vpop.trf.xlu0
        %v1262 = vpop.trf.xlu0
        %v1263 = vpop.trf.xlu0
        %v1264 = vpop.trf.xlu0
        %v1265 = vpop.trf.xlu0
        %v1266 = vpop.trf.xlu0
        %v1267 = vpop.trf.xlu0
        %v1268 = vpop.trf.xlu0
        %v1269 = vpop.trf.xlu0
        %v1270 = vpop.trf.xlu0
        %v1271 = vpop.trf.xlu0
        %v1272 = vpop.trf.xlu0
        %v1273 = vpop.trf.xlu0
        %v1275 = vsel %vm595, %v1258, 0
        %1277 = vmatprep.subr.mxu0 0.0
        %1278 = vmatpush1.msra.mxu0 1.0
        %1279 = vmatprep.subr.mxu0 0.0
        %1280 = vmatpush1.msra.mxu0 1.0
        %1281 = vmatprep.subr.mxu0 0.0
        %1282 = vmatpush1.msra.mxu0 1.0
        %1283 = vmatprep.subr.mxu0 0.0
        %1284 = vmatpush1.msra.mxu0 1.0
        %1285 = vmatprep.subr.mxu0 0.0
        %1286 = vmatpush1.msra.mxu0 0.0
        %1287 = vmatprep.subr.mxu0 0.0
        %1288 = vmatpush1.msra.mxu0 0.0
        %1289 = vmatprep.subr.mxu0 0.0
        %1290 = vmatpush1.msra.mxu0 0.0
        %1291 = vmatprep.subr.mxu0 0.0
        %1292 = vmatpush1.msra.mxu0 0.0
        %1293 = vmatprep.subr.mxu0 0.0
        %1294 = vmatpush1.msra.mxu0 0.0
        %1295 = vmatprep.subr.mxu0 0.0
        %1296 = vmatpush1.msra.mxu0 0.0
        %1297 = vmatprep.subr.mxu0 0.0
        %1298 = vmatpush1.msra.mxu0 0.0
        %1299 = vmatprep.subr.mxu0 0.0
        %1300 = vmatpush1.msra.mxu0 0.0
        %1301 = vmatprep.subr.mxu0 0.0
        %1302 = vmatpush1.msra.mxu0 0.0
        %1303 = vmatprep.subr.mxu0 0.0
        %1304 = vmatpush1.msra.mxu0 0.0
        %1305 = vmatprep.subr.mxu0 0.0
        %1306 = vmatpush1.msra.mxu0 0.0
        %1307 = vmatprep.subr.mxu0 0.0
        %1308 = vmatpush1.msra.mxu0 0.0
        %1309 = vmatprep.subr.mxu0 0.0
        %1310 = vmatpush1.msra.mxu0 0.0
        %1311 = vmatprep.subr.mxu0 0.0
        %1312 = vmatpush1.msra.mxu0 0.0
        %1313 = vmatprep.subr.mxu0 0.0
        %1314 = vmatpush1.msra.mxu0 0.0
        %1315 = vmatprep.subr.mxu0 0.0
        %1316 = vmatpush1.msra.mxu0 0.0
        %1317 = vmatprep.subr.mxu0 0.0
        %1318 = vmatpush1.msra.mxu0 0.0
        %1319 = vmatprep.subr.mxu0 0.0
        %1320 = vmatpush1.msra.mxu0 0.0
        %1321 = vmatprep.subr.mxu0 0.0
        %1322 = vmatpush1.msra.mxu0 0.0
        %1323 = vmatprep.subr.mxu0 0.0
        %1324 = vmatpush1.msra.mxu0 0.0
        %1325 = vmatprep.subr.mxu0 0.0
        %1326 = vmatpush1.msra.mxu0 0.0
        %1327 = vmatprep.subr.mxu0 0.0
        %1328 = vmatpush1.msra.mxu0 0.0
        %1329 = vmatprep.subr.mxu0 0.0
        %1330 = vmatpush1.msra.mxu0 0.0
        %1331 = vmatprep.subr.mxu0 0.0
        %1332 = vmatpush1.msra.mxu0 0.0
        %1333 = vmatprep.subr.mxu0 0.0
        %1334 = vmatpush1.msra.mxu0 0.0
        %1335 = vmatprep.subr.mxu0 0.0
        %1336 = vmatpush1.msra.mxu0 0.0
        %1337 = vmatprep.subr.mxu0 0.0
        %1338 = vmatpush1.msra.mxu0 0.0
        %1339 = vmatprep.subr.mxu0 0.0
        %1340 = vmatpush1.msra.mxu0 0.0
        %1341 = vmatprep.mubr.f32.mxu0 0.0
        %1342 = vmatmul.mubr.f32.gmra.mrb[0].mxu0 %v1275
        %v1343 = vpop.f32.mrb[0].mxu0
        %v1344 = vadd.f32 0.0, %v1343
        %v1345 = vpop.f32.mrb[0].mxu0
        %1346 = vdwg.mxu0
        %1347 = vmatprep.subr.mxu0 0.0
        %1348 = vmatpush1.msra.mxu0 %v731
        %1349 = vmatprep.subr.mxu0 0.0
        %1350 = vmatpush1.msra.mxu0 %v732
        %1351 = vmatprep.subr.mxu0 0.0
        %1352 = vmatpush1.msra.mxu0 %v733
        %1353 = vmatprep.subr.mxu0 0.0
        %1354 = vmatpush1.msra.mxu0 %v734
        %1355 = vmatprep.subr.mxu0 0.0
        %1356 = vmatpush1.msra.mxu0 0.0
        %1357 = vmatprep.subr.mxu0 0.0
        %1358 = vmatpush1.msra.mxu0 0.0
        %1359 = vmatprep.subr.mxu0 0.0
        %1360 = vmatpush1.msra.mxu0 0.0
        %1361 = vmatprep.subr.mxu0 0.0
        %1362 = vmatpush1.msra.mxu0 0.0
        %1363 = vmatprep.subr.mxu0 0.0
        %1364 = vmatpush1.msra.mxu0 0.0
        %1365 = vmatprep.subr.mxu0 0.0
        %1366 = vmatpush1.msra.mxu0 0.0
        %1367 = vmatprep.subr.mxu0 0.0
        %1368 = vmatpush1.msra.mxu0 0.0
        %1369 = vmatprep.subr.mxu0 0.0
        %1370 = vmatpush1.msra.mxu0 0.0
        %1371 = vmatprep.subr.mxu0 0.0
        %1372 = vmatpush1.msra.mxu0 0.0
        %1373 = vmatprep.subr.mxu0 0.0
        %1374 = vmatpush1.msra.mxu0 0.0
        %1375 = vmatprep.subr.mxu0 0.0
        %1376 = vmatpush1.msra.mxu0 0.0
        %1377 = vmatprep.subr.mxu0 0.0
        %1378 = vmatpush1.msra.mxu0 0.0
        %1379 = vmatprep.subr.mxu0 0.0
        %1380 = vmatpush1.msra.mxu0 0.0
        %1381 = vmatprep.subr.mxu0 0.0
        %1382 = vmatpush1.msra.mxu0 0.0
        %1383 = vmatprep.subr.mxu0 0.0
        %1384 = vmatpush1.msra.mxu0 0.0
        %1385 = vmatprep.subr.mxu0 0.0
        %1386 = vmatpush1.msra.mxu0 0.0
        %1387 = vmatprep.subr.mxu0 0.0
        %1388 = vmatpush1.msra.mxu0 0.0
        %1389 = vmatprep.subr.mxu0 0.0
        %1390 = vmatpush1.msra.mxu0 0.0
        %1391 = vmatprep.subr.mxu0 0.0
        %1392 = vmatpush1.msra.mxu0 0.0
        %1393 = vmatprep.subr.mxu0 0.0
        %1394 = vmatpush1.msra.mxu0 0.0
        %1395 = vmatprep.subr.mxu0 0.0
        %1396 = vmatpush1.msra.mxu0 0.0
        %1397 = vmatprep.subr.mxu0 0.0
        %1398 = vmatpush1.msra.mxu0 0.0
        %1399 = vmatprep.subr.mxu0 0.0
        %1400 = vmatpush1.msra.mxu0 0.0
        %1401 = vmatprep.subr.mxu0 0.0
        %1402 = vmatpush1.msra.mxu0 0.0
        %1403 = vmatprep.subr.mxu0 0.0
        %1404 = vmatpush1.msra.mxu0 0.0
        %1405 = vmatprep.subr.mxu0 0.0
        %1406 = vmatpush1.msra.mxu0 0.0
        %1407 = vmatprep.subr.mxu0 0.0
        %1408 = vmatpush1.msra.mxu0 0.0
        %1409 = vmatprep.subr.mxu0 0.0
        %1410 = vmatpush1.msra.mxu0 0.0
        %1411 = vmatprep.mubr.f32.mxu0 0.0
        %1412 = vmatmul.mubr.f32.gmra.mrb[0].mxu0 %v1275
        %v1413 = vpop.f32.mrb[0].mxu0
        %v1414 = vadd.f32 0.0, %v1413
        %v1415 = vpop.f32.mrb[0].mxu0
        %1416 = vdwg.mxu0
        %v1417 = vld [vmem:[%s534] sm:$0xff]
        %v1418 = vmul.f32 %v1104, %v1417
        %v1419 = vadd.f32 %v1418, %v1344
        %vm1420 = vcmask 7168
        %1421 = vst.msk [vmem:[%s534] sm:$0xff] %vm1420, %v1419
        %v1422 = vld [vmem:[%s541] sm:$0xff]
        %1424 = vset.pattern.permute.xlu0 0
        %1425 = vperm.xlu0 %1424, %v1104
        %v1426 = vpop.permute.xlu0 %1425
        %v1428 = vmul.f32 %v1426, %v1422
        %v1429 = vadd.f32 %v1428, %v1414
        %1430 = vst [vmem:[%s541] sm:$0xff] %v1429
        %1431 = vst.msk [vmem:[%s527] sm:$0xff] %vm1420, %v1101
        %s1432 = sand.u32 %s228, 1
        %s1433 = scalar_lea.sflag [#allocation4], %s1432
        %s1434 = sand.u32 %s228, 1
        %s1435 = smul.addr %s1434, 32
        %s1436 = scalar_lea.vmem [#allocation14], %s1435
        %s1437 = sand.u32 %s39, 1
        %s1438 = scalar_lea.sflag [#allocation16], %s1437
        %s1439 = sand.u32 %s254, 1
        %s1440 = smul.addr %s1439, 8
        %s1441 = scalar_lea.vmem [#allocation15], %s1440
        %s1442 = sand.u32 %s39, 1
        %s1443 = scalar_lea.sflag [#allocation16], %s1442
        %s1444 = sand.u32 %s280, 1
        %s1445 = smul.addr %s1444, 8
        %s1446 = scalar_lea.vmem [#allocation17], %s1445
        %s1447 = sand.u32 %s306, 1
        %s1448 = scalar_lea.sflag [#allocation19], %s1447
        %s1449 = sand.u32 %s306, 1
        %s1450 = smul.addr %s1449, 8
        %s1451 = scalar_lea.vmem [#allocation18], %s1450
        // Predicated region
        $region81: #{tpu_custom_call.1} parent=47 // pred_check
          %p1452 = pneg %p238
        $region82: #{tpu_custom_call.1} parent=47 // pred_check_branch
          %1454 = sbr.rel (%p1452) target = $region84
        $region83: #{tpu_custom_call.1} parent=47 // pred_region
          %s1455 = smul.u32 %s43, 2
          %s1456 = sadd.s32 %s1455, %s44
          %s1457 = smul.u32 4, %s1456
          %s1459 = ssub.s32 512, 512
          %1460 = vsyncadd %s1433, %s1459
          %s1461 = smul.addr %s1457, 128
          %s1462 = scalar_lea.hbm %s7, %s1461
          %s1463 = sshll.u32 %s1436, 4
          %s1464 = int_to_ptr.vmem [resolvable:$true] %s1463
          %1469 = dma.vmem_to_hbm [thread:$0]  %s1464, 512, %s1462, %s1433, 128, 128, 8
        $region84: #{tpu_custom_call.1} parent=47 // pred_fallthru
          _
        // Predicated region
        $region85: #{tpu_custom_call.1} parent=47 // pred_check
          %p1470 = pneg %p264
        $region86: #{tpu_custom_call.1} parent=47 // pred_check_branch
          %1472 = sbr.rel (%p1470) target = $region88
        $region87: #{tpu_custom_call.1} parent=47 // pred_region
          %s1474 = ssub.s32 128, 128
          %1475 = vsyncadd %s1438, %s1474
          %s1476 = smul.addr %s43, 128
          %s1477 = scalar_lea.hbm %s8, %s1476
          %s1479 = sshll.u32 %s1441, 4
          %s1480 = int_to_ptr.vmem [resolvable:$true] %s1479
          %1482 = dma.vmem_to_hbm [thread:$0]  %s1480, 128, %s1477, %s1438
        $region88: #{tpu_custom_call.1} parent=47 // pred_fallthru
          _
        // Predicated region
        $region89: #{tpu_custom_call.1} parent=47 // pred_check
          %p1483 = pneg %p290
        $region90: #{tpu_custom_call.1} parent=47 // pred_check_branch
          %1485 = sbr.rel (%p1483) target = $region92
        $region91: #{tpu_custom_call.1} parent=47 // pred_region
          %s1487 = ssub.s32 128, 128
          %1488 = vsyncadd %s1443, %s1487
          %s1489 = smul.addr %s43, 128
          %s1490 = scalar_lea.hbm %s9, %s1489
          %s1492 = sshll.u32 %s1446, 4
          %s1493 = int_to_ptr.vmem [resolvable:$true] %s1492
          %1495 = dma.vmem_to_hbm [thread:$0]  %s1493, 128, %s1490, %s1443
        $region92: #{tpu_custom_call.1} parent=47 // pred_fallthru
          _
        // Predicated region
        $region93: #{tpu_custom_call.1} parent=47 // pred_check
          %p1496 = pneg %p316
        $region94: #{tpu_custom_call.1} parent=47 // pred_check_branch
          %1498 = sbr.rel (%p1496) target = $region96
        $region95: #{tpu_custom_call.1} parent=47 // pred_region
          %s1500 = ssub.s32 128, 128
          %1501 = vsyncadd %s1448, %s1500
          %s1502 = smul.addr %s43, 128
          %s1503 = scalar_lea.hbm %s10, %s1502
          %s1505 = sshll.u32 %s1451, 4
          %s1506 = int_to_ptr.vmem [resolvable:$true] %s1505
          %1508 = dma.vmem_to_hbm [thread:$0]  %s1506, 128, %s1503, %s1448
        $region96: #{tpu_custom_call.1} parent=47 // pred_fallthru
          _
      $region48: #{tpu_custom_call.1} parent=5 // pred_fallthru
        _
      %p1509 = scmp.le.s32.totalorder 2, %s34
      // Predicated region
      $region97: #{tpu_custom_call.1} parent=5 // pred_check
        %p1510 = pneg %p1509
      $region98: #{tpu_custom_call.1} parent=5 // pred_check_branch
        %1512 = sbr.rel (%p1510) target = $region100
      $region99: #{tpu_custom_call.1} parent=5 // pred_region
        %s1513 = ssub.s32 %s34, 2
        // Predicated region
        $region101: #{tpu_custom_call.1} parent=99 // pred_check
          %p1514 = pneg %p244
        $region102: #{tpu_custom_call.1} parent=99 // pred_check_branch
          %1516 = sbr.rel (%p1514) target = $region104
        $region103: #{tpu_custom_call.1} parent=99 // pred_region
          %s1517 = sand.u32 %s229, 1
          %s1518 = scalar_lea.sflag [#allocation4], %s1517
          %s1519 = sand.u32 %s229, 1
          %s1520 = smul.addr %s1519, 32
          %s1521 = scalar_lea.vmem [#allocation14], %s1520
          %1522 = dma.done %s1518, 512
        $region104: #{tpu_custom_call.1} parent=99 // pred_fallthru
          _
        // Predicated region
        $region105: #{tpu_custom_call.1} parent=99 // pred_check
          %p1523 = pneg %p270
        $region106: #{tpu_custom_call.1} parent=99 // pred_check_branch
          %1525 = sbr.rel (%p1523) target = $region108
        $region107: #{tpu_custom_call.1} parent=99 // pred_region
          %s1526 = sand.u32 %s40, 1
          %s1527 = scalar_lea.sflag [#allocation16], %s1526
          %s1528 = sand.u32 %s255, 1
          %s1529 = smul.addr %s1528, 8
          %s1530 = scalar_lea.vmem [#allocation15], %s1529
          %1531 = dma.done %s1527, 128
        $region108: #{tpu_custom_call.1} parent=99 // pred_fallthru
          _
        // Predicated region
        $region109: #{tpu_custom_call.1} parent=99 // pred_check
          %p1532 = pneg %p296
        $region110: #{tpu_custom_call.1} parent=99 // pred_check_branch
          %1534 = sbr.rel (%p1532) target = $region112
        $region111: #{tpu_custom_call.1} parent=99 // pred_region
          %s1535 = sand.u32 %s40, 1
          %s1536 = scalar_lea.sflag [#allocation16], %s1535
          %s1537 = sand.u32 %s281, 1
          %s1538 = smul.addr %s1537, 8
          %s1539 = scalar_lea.vmem [#allocation17], %s1538
          %1540 = dma.done %s1536, 128
        $region112: #{tpu_custom_call.1} parent=99 // pred_fallthru
          _
        // Predicated region
        $region113: #{tpu_custom_call.1} parent=99 // pred_check
          %p1541 = pneg %p322
        $region114: #{tpu_custom_call.1} parent=99 // pred_check_branch
          %1543 = sbr.rel (%p1541) target = $region116
        $region115: #{tpu_custom_call.1} parent=99 // pred_region
          %s1544 = sand.u32 %s307, 1
          %s1545 = scalar_lea.sflag [#allocation19], %s1544
          %s1546 = sand.u32 %s307, 1
          %s1547 = smul.addr %s1546, 8
          %s1548 = scalar_lea.vmem [#allocation18], %s1547
          %1549 = dma.done %s1545, 128
        $region116: #{tpu_custom_call.1} parent=99 // pred_fallthru
          _
      $region100: #{tpu_custom_call.1} parent=5 // pred_fallthru
        _
    $region6: #{tpu_custom_call.1} parent=1 // loop_footer
      %s38 = sadd.s32 1, %s34
    $region7: #{tpu_custom_call.1} parent=1 // loop_footer_branch
      %33 = sbr.rel target = $region3
    $region8: #{tpu_custom_call.1} parent=1 // loop_exit
      _
    %1550 = vsyncpa [#allocation3], 1
    %s1551 = scalar_lea.sflag [#allocation3], 1
    %1552 = vsyncpa %s1551, 1
    %1553 = vsyncpa [#allocation6], 1
    %s1554 = scalar_lea.sflag [#allocation6], 1
    %1555 = vsyncpa %s1554, 1
    %1556 = vsyncpa [#allocation9], 1
    %1557 = vsyncpa [#allocation12], 1
    %1558 = vsyncpa [#allocation4], 1
    %s1559 = scalar_lea.sflag [#allocation4], 1
    %1560 = vsyncpa %s1559, 1
    %1561 = vsyncpa [#allocation16], 1
    %s1562 = scalar_lea.sflag [#allocation16], 1
    %1563 = vsyncpa %s1562, 1
    %1564 = vsyncpa [#allocation19], 1
    %s1565 = scalar_lea.sflag [#allocation19], 1
    %1566 = vsyncpa %s1565, 1

</llo_original>
